<compile_context>
chip_gen: v5e
topology: v5e:2x2
jax: 0.10.0
libtpu: 0.0.40
codegen_flags: <defaults>
</compile_context>

<pallas_src>
import functools

import jax
import jax.numpy as jnp
from jax.experimental import pallas as pl
from jax.experimental.pallas import tpu as pltpu

LN_EPS = 1e-5


def _tpu_kind():
    try:
        return jax.devices()[0].device_kind.lower()
    except Exception:  # pragma: no cover - device query should not fail
        return ""


def _pick_token_tile(tl, cap):
    """Largest multiple-of-8 divisor of tl under cap (falls back to cap + masked tail)."""
    if tl <= cap:
        return tl
    for tm in range(cap - cap % 8, 7, -8):
        if tl % tm == 0:
            return tm
    return cap


# ----------------------------------------------------------------------------
# Kernel 1: fused [patch-embed matmul + bias + LayerNorm + spatial/temporal mean
# pool] for BOTH streams.  Grid = (stream, batch, token_tiles); the token axis is
# the reduction ("arbitrary") axis and the pooled output block stays resident in
# VMEM across it (accumulator pattern).  Affine (gamma/beta) applied once at the
# last token tile.
# ----------------------------------------------------------------------------
def _embed_ln_pool_kernel(x_ref, w_ref, b_ref, g_ref, beta_ref, o_ref,
                          *, tl_total, tm, masked):
    t = pl.program_id(2)

    @pl.when(t == 0)
    def _init():
        o_ref[...] = jnp.zeros_like(o_ref)

    x = x_ref[0, 0]          # (tm, K)  bf16
    w = w_ref[0]             # (K, D)   bf16
    # MXU matmul in bf16, f32 accumulation; conv bias added before LayerNorm.
    y = jnp.dot(x, w, preferred_element_type=jnp.float32) + b_ref[0]   # (tm, D) f32

    # LayerNorm stats over hidden dim — two-pass (better numerics, same VPU cost).
    mu = jnp.mean(y, axis=-1, keepdims=True)
    d = y - mu
    var = jnp.mean(d * d, axis=-1, keepdims=True)
    y_hat = d * jax.lax.rsqrt(var + LN_EPS)          # normalized, NO affine yet

    inv_tl = 1.0 / tl_total
    if masked:
        # Ragged tail only: fold the row-validity mask into the pooling weight.
        row = jax.lax.broadcasted_iota(jnp.int32, (tm, 1), 0)
        w_row = jnp.where(row < (tl_total - t * tm), inv_tl, 0.0)
        contrib = jnp.sum(y_hat * w_row, axis=0)     # (D,)
    else:
        contrib = jnp.sum(y_hat, axis=0) * inv_tl    # (D,)

    # mean over L tokens then T frames == mean over all T*L tokens.
    o_ref[...] += contrib[None, None, None, :]

    @pl.when(t == pl.num_programs(2) - 1)
    def _finalize():
        # Affine hoisted out of the token loop: mean(y_hat*g + b) == mean(y_hat)*g + b.
        o_ref[...] = o_ref[...] * g_ref[0, 0] + beta_ref[0, 0]


def embed_ln_pool(patches, w, b, g, beta):
    """patches: [2, B, TL, K] bf16;  w: [2, K, D] bf16;  b/g/beta: [2, 1, D] f32.
    Returns pooled+LayerNormed features [2, B, D] f32."""
    S, B, TL, K = patches.shape
    D = w.shape[-1]

    kind = _tpu_kind()
    is_v5e = ("v5 lite" in kind) or ("v5e" in kind) or ("v5litepod" in kind)
    cap = 1024 if is_v5e else 2048          # bigger token tiles on v6e/v7x
    tm = _pick_token_tile(TL, cap)
    grid_t = pl.cdiv(TL, tm)
    masked = (TL % tm) != 0

    # v7x has 2 TensorCores: shard the stream axis across them.  Gated on device
    # kind so v5e/v6e keep plain "parallel" codegen.
    multi_tc = ("v7" in kind) or ("7x" in kind)
    stream_sem = pltpu.CORE_PARALLEL if multi_tc else pltpu.PARALLEL

    kernel = functools.partial(_embed_ln_pool_kernel,
                               tl_total=TL, tm=tm, masked=masked)
    out = pl.pallas_call(
        kernel,
        out_shape=jax.ShapeDtypeStruct((S, B, 8, D), jnp.float32),
        grid_spec=pltpu.PrefetchScalarGridSpec(
            num_scalar_prefetch=0,
            grid=(S, B, grid_t),
            in_specs=[
                pl.BlockSpec((1, 1, tm, K), lambda s, bb, t: (s, bb, t, 0)),
                pl.BlockSpec((1, K, D), lambda s, bb, t: (s, 0, 0)),
                pl.BlockSpec((1, 1, D), lambda s, bb, t: (s, 0, 0)),
                pl.BlockSpec((1, 1, D), lambda s, bb, t: (s, 0, 0)),
                pl.BlockSpec((1, 1, D), lambda s, bb, t: (s, 0, 0)),
            ],
            out_specs=pl.BlockSpec((1, 1, 8, D), lambda s, bb, t: (s, bb, 0, 0)),
        ),
        compiler_params=pltpu.CompilerParams(
            dimension_semantics=(stream_sem, pltpu.PARALLEL, pltpu.ARBITRARY),
            vmem_limit_bytes=32 * 1024 * 1024,
        ),
    )(patches, w, b, g, beta)
    return out[:, :, 0, :]   # [2, B, D]


# ----------------------------------------------------------------------------
# Kernel 2: fusion regressor MLP
#   Linear->ReLU->(Dropout)->Linear->ReLU->(Dropout)->Linear
# bf16 weights/activations for the MXU, f32 accumulation.  Final layer is
# pre-padded to 128 output lanes at init (lane-dense stores); sliced outside.
# ----------------------------------------------------------------------------
def _regressor_kernel(x_ref, w1_ref, b1_ref, w2_ref, b2_ref, w3_ref, b3_ref, o_ref):
    h = jnp.dot(x_ref[...], w1_ref[...], preferred_element_type=jnp.float32) + b1_ref[...]
    h = jnp.maximum(h, 0.0).astype(jnp.bfloat16)
    h = jnp.dot(h, w2_ref[...], preferred_element_type=jnp.float32) + b2_ref[...]
    h = jnp.maximum(h, 0.0).astype(jnp.bfloat16)
    o_ref[...] = jnp.dot(h, w3_ref[...], preferred_element_type=jnp.float32) + b3_ref[...]


def regressor(x, params):
    B = x.shape[0]
    Bp = max(8, ((B + 7) // 8) * 8)         # sublane-unmasked stores
    xb = x.astype(jnp.bfloat16)
    if Bp != B:
        xb = jnp.pad(xb, ((0, Bp - B), (0, 0)))
    out = pl.pallas_call(
        _regressor_kernel,
        out_shape=jax.ShapeDtypeStruct((Bp, 128), jnp.float32),
    )(xb, params["w1"], params["b1"], params["w2"], params["b2"],
      params["w3"], params["b3"])
    return out[:B, :1]


# ----------------------------------------------------------------------------
# Glue / parameter setup
# ----------------------------------------------------------------------------
def _patchify(frames, patch_size):
    """NCHW frames -> non-overlapping PxP patches, flattened (c, ph, pw) per patch
    to match the flattened Conv2d weight layout [D, C, P, P].
    Returns bf16 [B, T*L, K] (cast done BEFORE the transpose to halve moved bytes).
    """
    # TODO(synk): a fully in-kernel patch gather would avoid materializing this
    # tensor in HBM, but splitting W-lanes into (token, pw) inside VMEM is a
    # cross-lane relayout Mosaic handles poorly; the XLA transpose is kept.
    B, T, C, H, W = frames.shape
    P = patch_size
    Hp, Wp = H // P, W // P
    x = frames.astype(jnp.bfloat16)
    x = x.reshape(B, T, C, Hp, P, Wp, P)
    x = x.transpose(0, 1, 3, 5, 2, 4, 6)              # B,T,Hp,Wp,C,P,P
    return x.reshape(B, T * Hp * Wp, C * P * P)


def init_backbone_params(key, C, P, D):
    K = C * P * P
    k1, k2 = jax.random.split(key, 2)
    w = jax.random.normal(k1, (K, D), jnp.float32) * (1.0 / jnp.sqrt(K))
    return {
        "patch_w": w.astype(jnp.bfloat16),            # [K, D] bf16 (MXU input)
        "patch_b": jax.random.normal(k2, (1, D), jnp.float32) * 0.02,
        "ln_g": jnp.ones((1, D), jnp.float32),
        "ln_b": jnp.zeros((1, D), jnp.float32),
    }


def init_regressor_params(key, fusion_dim, h1=512, h2=128):
    ks = jax.random.split(key, 6)
    w3 = jax.random.normal(ks[4], (h2, 1), jnp.float32) / jnp.sqrt(h2)
    b3 = jax.random.normal(ks[5], (1, 1), jnp.float32) * 0.02
    # Pre-pad the 1-wide output projection to 128 lanes ONCE at init.
    w3p = jnp.zeros((h2, 128), jnp.float32).at[:, :1].set(w3).astype(jnp.bfloat16)
    b3p = jnp.zeros((1, 128), jnp.float32).at[:, :1].set(b3)
    return {
        "w1": (jax.random.normal(ks[0], (fusion_dim, h1), jnp.float32)
               / jnp.sqrt(fusion_dim)).astype(jnp.bfloat16),
        "b1": jax.random.normal(ks[1], (1, h1), jnp.float32) * 0.02,
        "w2": (jax.random.normal(ks[2], (h1, h2), jnp.float32)
               / jnp.sqrt(h1)).astype(jnp.bfloat16),
        "b2": jax.random.normal(ks[3], (1, h2), jnp.float32) * 0.02,
        "w3": w3p,
        "b3": b3p,
    }


def speed_estimator_forward(rgb_frames, flow_frames, params, patch_size=4):
    rgb_p = _patchify(rgb_frames, patch_size)
    flow_p = _patchify(flow_frames, patch_size)
    patches = jnp.stack([rgb_p, flow_p], axis=0)             # [2, B, TL, K] bf16

    w = jnp.stack([params["rgb_backbone"]["patch_w"],
                   params["flow_backbone"]["patch_w"]], 0)
    b = jnp.stack([params["rgb_backbone"]["patch_b"],
                   params["flow_backbone"]["patch_b"]], 0)
    g = jnp.stack([params["rgb_backbone"]["ln_g"],
                   params["flow_backbone"]["ln_g"]], 0)
    beta = jnp.stack([params["rgb_backbone"]["ln_b"],
                      params["flow_backbone"]["ln_b"]], 0)

    pooled = embed_ln_pool(patches, w, b, g, beta)            # [2, B, D] f32
    fused = jnp.concatenate([pooled[0], pooled[1]], axis=1)   # fusion_method='concat'
    return regressor(fused, params["regressor"])              # [B, 1]


if __name__ == "__main__":
    # Small shapes consistent with the module's forward: [B, T, C, H, W]
    B, T, C, H, W = 2, 4, 3, 32, 32
    PATCH = 4
    HIDDEN = 128          # stand-in hidden_size for each backbone

    key = jax.random.PRNGKey(0)
    k_rgb, k_flow, k_pb1, k_pb2, k_reg = jax.random.split(key, 5)

    rgb_frames = jax.random.normal(k_rgb, (B, T, C, H, W), jnp.float32)
    flow_frames = jax.random.normal(k_flow, (B, T, C, H, W), jnp.float32)

    params = {
        "rgb_backbone": init_backbone_params(k_pb1, C, PATCH, HIDDEN),
        "flow_backbone": init_backbone_params(k_pb2, C, PATCH, HIDDEN),
        "regressor": init_regressor_params(k_reg, 2 * HIDDEN),
    }

    fwd = jax.jit(functools.partial(speed_estimator_forward, patch_size=PATCH))
    speed = fwd(rgb_frames, flow_frames, params)
    speed = jax.block_until_ready(speed)
    assert speed.shape == (B, 1) and speed.dtype == jnp.float32
    print("KERNEL_OK")
</pallas_src>

<mosaic_0001>
module attributes {stable_mosaic.version = 11 : i64} {
  func.func @_embed_ln_pool_kernel(%arg0: i32, %arg1: i32, %arg2: i32, %arg3: memref<1x1x256x48xbf16, #tpu.memory_space<vmem>>, %arg4: memref<1x48x128xbf16, #tpu.memory_space<vmem>>, %arg5: memref<1x1x128xf32, #tpu.memory_space<vmem>>, %arg6: memref<1x1x128xf32, #tpu.memory_space<vmem>>, %arg7: memref<1x1x128xf32, #tpu.memory_space<vmem>>, %arg8: memref<1x1x8x128xf32, #tpu.memory_space<vmem>>) attributes {dimension_semantics = [#tpu.dimension_semantics<parallel>, #tpu.dimension_semantics<parallel>, #tpu.dimension_semantics<arbitrary>], iteration_bounds = array<i64: 2, 2, 1>, scalar_prefetch = 0 : i64, scratch_operands = 0 : i64, tpu.core_type = #tpu.core_type<tc>, window_params = [{transform_indices = @transform_0, window_bounds = array<i64: 1, 1, 256, 48>}, {transform_indices = @transform_1, window_bounds = array<i64: 1, 48, 128>}, {transform_indices = @transform_2, window_bounds = array<i64: 1, 1, 128>}, {transform_indices = @transform_3, window_bounds = array<i64: 1, 1, 128>}, {transform_indices = @transform_4, window_bounds = array<i64: 1, 1, 128>}, {transform_indices = @transform_5, window_bounds = array<i64: 1, 1, 8, 128>}]} {
    %c0_i32 = arith.constant 0 : i32
    %0 = arith.cmpi eq, %arg2, %c0_i32 : i32
    %1 = arith.extui %0 : i1 to i32
    %c0_i32_0 = arith.constant 0 : i32
    %2 = arith.cmpi ne, %1, %c0_i32_0 : i32
    scf.if %2 {
      %cst_27 = arith.constant 0.000000e+00 : f32
      %39 = vector.broadcast %cst_27 : f32 to vector<1x1x8x128xf32>
      %c0_28 = arith.constant 0 : index
      %c0_29 = arith.constant 0 : index
      %c0_30 = arith.constant 0 : index
      %c0_31 = arith.constant 0 : index
      %40 = vector.load %arg8[%c0_28, %c0_29, %c0_30, %c0_31] : memref<1x1x8x128xf32, #tpu.memory_space<vmem>>, vector<1x1x8x128xf32>
      tpu.vector_store %arg8[%c0_28, %c0_29, %c0_30, %c0_31], %39 {strides = array<i32>} : memref<1x1x8x128xf32, #tpu.memory_space<vmem>>, vector<1x1x8x128xf32>,
    } else {
    }
    %c0 = arith.constant 0 : index
    %c0_1 = arith.constant 0 : index
    %c0_2 = arith.constant 0 : index
    %c0_3 = arith.constant 0 : index
    %3 = vector.load %arg3[%c0, %c0_1, %c0_2, %c0_3] : memref<1x1x256x48xbf16, #tpu.memory_space<vmem>>, vector<1x1x256x48xbf16>
    %4 = vector.shape_cast %3 : vector<1x1x256x48xbf16> to vector<256x48xbf16>
    %c0_4 = arith.constant 0 : index
    %c0_5 = arith.constant 0 : index
    %c0_6 = arith.constant 0 : index
    %5 = vector.load %arg4[%c0_4, %c0_5, %c0_6] : memref<1x48x128xbf16, #tpu.memory_space<vmem>>, vector<1x48x128xbf16>
    %6 = vector.shape_cast %5 : vector<1x48x128xbf16> to vector<48x128xbf16>
    %cst = arith.constant dense<0.000000e+00> : vector<256x128xf32>
    %7 = tpu.matmul %4, %6, %cst {dimension_numbers = #tpu.dot_dimension_numbers<[1], [0], [0], [1], [0, 0, 1, 1], [], []>} : vector<256x48xbf16>, vector<48x128xbf16>, vector<256x128xf32> -> vector<256x128xf32>
    %c0_7 = arith.constant 0 : index
    %c0_8 = arith.constant 0 : index
    %c0_9 = arith.constant 0 : index
    %8 = vector.load %arg5[%c0_7, %c0_8, %c0_9] : memref<1x1x128xf32, #tpu.memory_space<vmem>>, vector<1x1x128xf32>
    %9 = vector.shape_cast %8 : vector<1x1x128xf32> to vector<1x128xf32>
    %10 = vector.broadcast %9 : vector<1x128xf32> to vector<256x128xf32>
    %11 = arith.addf %7, %10 : vector<256x128xf32>
    %cst_10 = arith.constant dense<0.000000e+00> : vector<256xf32>
    %12 = vector.multi_reduction <add>, %11, %cst_10 [1] : vector<256x128xf32> to vector<256xf32>
    %13 = vector.shape_cast %12 : vector<256xf32> to vector<256x1xf32>
    %cst_11 = arith.constant 1.280000e+02 : f32
    %14 = vector.broadcast %cst_11 : f32 to vector<256x1xf32>
    %15 = arith.divf %13, %14 : vector<256x1xf32>
    %16 = vector.broadcast %15 : vector<256x1xf32> to vector<256x128xf32>
    %17 = arith.subf %11, %16 : vector<256x128xf32>
    %18 = arith.mulf %17, %17 : vector<256x128xf32>
    %cst_12 = arith.constant dense<0.000000e+00> : vector<256xf32>
    %19 = vector.multi_reduction <add>, %18, %cst_12 [1] : vector<256x128xf32> to vector<256xf32>
    %20 = vector.shape_cast %19 : vector<256xf32> to vector<256x1xf32>
    %cst_13 = arith.constant 1.280000e+02 : f32
    %21 = vector.broadcast %cst_13 : f32 to vector<256x1xf32>
    %22 = arith.divf %20, %21 : vector<256x1xf32>
    %cst_14 = arith.constant 9.99999974E-6 : f32
    %23 = vector.broadcast %cst_14 : f32 to vector<256x1xf32>
    %24 = arith.addf %22, %23 : vector<256x1xf32>
    %25 = math.rsqrt %24 : vector<256x1xf32>
    %26 = vector.broadcast %25 : vector<256x1xf32> to vector<256x128xf32>
    %27 = arith.mulf %17, %26 : vector<256x128xf32>
    %cst_15 = arith.constant dense<0.000000e+00> : vector<128xf32>
    %28 = vector.multi_reduction <add>, %27, %cst_15 [0] : vector<256x128xf32> to vector<128xf32>
    %cst_16 = arith.constant 3.906250e-03 : f32
    %29 = vector.broadcast %cst_16 : f32 to vector<128xf32>
    %30 = arith.mulf %28, %29 : vector<128xf32>
    %c0_17 = arith.constant 0 : index
    %c0_18 = arith.constant 0 : index
    %c0_19 = arith.constant 0 : index
    %c0_20 = arith.constant 0 : index
    %31 = vector.load %arg8[%c0_17, %c0_18, %c0_19, %c0_20] : memref<1x1x8x128xf32, #tpu.memory_space<vmem>>, vector<1x1x8x128xf32>
    %32 = vector.shape_cast %30 : vector<128xf32> to vector<1x1x1x128xf32>
    %33 = vector.broadcast %32 : vector<1x1x1x128xf32> to vector<1x1x8x128xf32>
    %34 = arith.addf %31, %33 : vector<1x1x8x128xf32>
    %c0_21 = arith.constant 0 : index
    %c0_22 = arith.constant 0 : index
    %c0_23 = arith.constant 0 : index
    %c0_24 = arith.constant 0 : index
    %35 = vector.load %arg8[%c0_21, %c0_22, %c0_23, %c0_24] : memref<1x1x8x128xf32, #tpu.memory_space<vmem>>, vector<1x1x8x128xf32>
    tpu.vector_store %arg8[%c0_21, %c0_22, %c0_23, %c0_24], %34 {strides = array<i32>} : memref<1x1x8x128xf32, #tpu.memory_space<vmem>>, vector<1x1x8x128xf32>,
    %c0_i32_25 = arith.constant 0 : i32
    %36 = arith.cmpi eq, %arg2, %c0_i32_25 : i32
    %37 = arith.extui %36 : i1 to i32
    %c0_i32_26 = arith.constant 0 : i32
    %38 = arith.cmpi ne, %37, %c0_i32_26 : i32
    scf.if %38 {
      %c0_27 = arith.constant 0 : index
      %c0_28 = arith.constant 0 : index
      %c0_29 = arith.constant 0 : index
      %c0_30 = arith.constant 0 : index
      %39 = vector.load %arg8[%c0_27, %c0_28, %c0_29, %c0_30] : memref<1x1x8x128xf32, #tpu.memory_space<vmem>>, vector<1x1x8x128xf32>
      %c0_31 = arith.constant 0 : index
      %c0_32 = arith.constant 0 : index
      %c0_33 = arith.constant 0 : index
      %40 = vector.load %arg6[%c0_31, %c0_32, %c0_33] : memref<1x1x128xf32, #tpu.memory_space<vmem>>, vector<1x1x128xf32>
      %41 = vector.shape_cast %40 : vector<1x1x128xf32> to vector<128xf32>
      %42 = vector.shape_cast %41 : vector<128xf32> to vector<1x1x1x128xf32>
      %43 = vector.broadcast %42 : vector<1x1x1x128xf32> to vector<1x1x8x128xf32>
      %44 = arith.mulf %39, %43 : vector<1x1x8x128xf32>
      %c0_34 = arith.constant 0 : index
      %c0_35 = arith.constant 0 : index
      %c0_36 = arith.constant 0 : index
      %45 = vector.load %arg7[%c0_34, %c0_35, %c0_36] : memref<1x1x128xf32, #tpu.memory_space<vmem>>, vector<1x1x128xf32>
      %46 = vector.shape_cast %45 : vector<1x1x128xf32> to vector<128xf32>
      %47 = vector.shape_cast %46 : vector<128xf32> to vector<1x1x1x128xf32>
      %48 = vector.broadcast %47 : vector<1x1x1x128xf32> to vector<1x1x8x128xf32>
      %49 = arith.addf %44, %48 : vector<1x1x8x128xf32>
      %c0_37 = arith.constant 0 : index
      %c0_38 = arith.constant 0 : index
      %c0_39 = arith.constant 0 : index
      %c0_40 = arith.constant 0 : index
      %50 = vector.load %arg8[%c0_37, %c0_38, %c0_39, %c0_40] : memref<1x1x8x128xf32, #tpu.memory_space<vmem>>, vector<1x1x8x128xf32>
      tpu.vector_store %arg8[%c0_37, %c0_38, %c0_39, %c0_40], %49 {strides = array<i32>} : memref<1x1x8x128xf32, #tpu.memory_space<vmem>>, vector<1x1x8x128xf32>,
    } else {
    }
    return
  }
  func.func @transform_0(%arg0: i32, %arg1: i32, %arg2: i32) -> (i32, i32, i32, i32) {
    %c0_i32 = arith.constant 0 : i32
    %c0_i32_0 = arith.constant 0 : i32
    return %arg0, %arg1, %arg2, %c0_i32 : i32, i32, i32, i32
  }
  func.func @transform_1(%arg0: i32, %arg1: i32, %arg2: i32) -> (i32, i32, i32) {
    %c0_i32 = arith.constant 0 : i32
    %c0_i32_0 = arith.constant 0 : i32
    %c0_i32_1 = arith.constant 0 : i32
    return %arg0, %c0_i32, %c0_i32_0 : i32, i32, i32
  }
  func.func @transform_2(%arg0: i32, %arg1: i32, %arg2: i32) -> (i32, i32, i32) {
    %c0_i32 = arith.constant 0 : i32
    %c0_i32_0 = arith.constant 0 : i32
    %c0_i32_1 = arith.constant 0 : i32
    return %arg0, %c0_i32, %c0_i32_0 : i32, i32, i32
  }
  func.func @transform_3(%arg0: i32, %arg1: i32, %arg2: i32) -> (i32, i32, i32) {
    %c0_i32 = arith.constant 0 : i32
    %c0_i32_0 = arith.constant 0 : i32
    %c0_i32_1 = arith.constant 0 : i32
    return %arg0, %c0_i32, %c0_i32_0 : i32, i32, i32
  }
  func.func @transform_4(%arg0: i32, %arg1: i32, %arg2: i32) -> (i32, i32, i32) {
    %c0_i32 = arith.constant 0 : i32
    %c0_i32_0 = arith.constant 0 : i32
    %c0_i32_1 = arith.constant 0 : i32
    return %arg0, %c0_i32, %c0_i32_0 : i32, i32, i32
  }
  func.func @transform_5(%arg0: i32, %arg1: i32, %arg2: i32) -> (i32, i32, i32, i32) {
    %c0_i32 = arith.constant 0 : i32
    %c0_i32_0 = arith.constant 0 : i32
    %c0_i32_1 = arith.constant 0 : i32
    return %arg0, %arg1, %c0_i32, %c0_i32_0 : i32, i32, i32, i32
  }
}

module attributes {stable_mosaic.version = 11 : i64} {
  func.func @_regressor_kernel(%arg0: memref<8x256xbf16, #tpu.memory_space<vmem>>, %arg1: memref<256x512xbf16, #tpu.memory_space<vmem>>, %arg2: memref<1x512xf32, #tpu.memory_space<vmem>>, %arg3: memref<512x128xbf16, #tpu.memory_space<vmem>>, %arg4: memref<1x128xf32, #tpu.memory_space<vmem>>, %arg5: memref<128x128xbf16, #tpu.memory_space<vmem>>, %arg6: memref<1x128xf32, #tpu.memory_space<vmem>>, %arg7: memref<8x128xf32, #tpu.memory_space<vmem>>) attributes {dimension_semantics = [], scalar_prefetch = 0 : i64, scratch_operands = 0 : i64, tpu.core_type = #tpu.core_type<tc>} {
    %c0 = arith.constant 0 : index
    %c0_0 = arith.constant 0 : index
    %0 = vector.load %arg0[%c0, %c0_0] : memref<8x256xbf16, #tpu.memory_space<vmem>>, vector<8x256xbf16>
    %c0_1 = arith.constant 0 : index
    %c0_2 = arith.constant 0 : index
    %1 = vector.load %arg1[%c0_1, %c0_2] : memref<256x512xbf16, #tpu.memory_space<vmem>>, vector<256x512xbf16>
    %cst = arith.constant dense<0.000000e+00> : vector<8x512xf32>
    %2 = tpu.matmul %0, %1, %cst {dimension_numbers = #tpu.dot_dimension_numbers<[1], [0], [0], [1], [0, 0, 1, 1], [], []>} : vector<8x256xbf16>, vector<256x512xbf16>, vector<8x512xf32> -> vector<8x512xf32>
    %c0_3 = arith.constant 0 : index
    %c0_4 = arith.constant 0 : index
    %3 = vector.load %arg2[%c0_3, %c0_4] : memref<1x512xf32, #tpu.memory_space<vmem>>, vector<1x512xf32>
    %4 = vector.broadcast %3 : vector<1x512xf32> to vector<8x512xf32>
    %5 = arith.addf %2, %4 : vector<8x512xf32>
    %cst_5 = arith.constant 0.000000e+00 : f32
    %6 = vector.broadcast %cst_5 : f32 to vector<8x512xf32>
    %7 = arith.maximumf %5, %6 : vector<8x512xf32>
    %8 = arith.truncf %7 : vector<8x512xf32> to vector<8x512xbf16>
    %c0_6 = arith.constant 0 : index
    %c0_7 = arith.constant 0 : index
    %9 = vector.load %arg3[%c0_6, %c0_7] : memref<512x128xbf16, #tpu.memory_space<vmem>>, vector<512x128xbf16>
    %cst_8 = arith.constant dense<0.000000e+00> : vector<8x128xf32>
    %10 = tpu.matmul %8, %9, %cst_8 {dimension_numbers = #tpu.dot_dimension_numbers<[1], [0], [0], [1], [0, 0, 1, 1], [], []>} : vector<8x512xbf16>, vector<512x128xbf16>, vector<8x128xf32> -> vector<8x128xf32>
    %c0_9 = arith.constant 0 : index
    %c0_10 = arith.constant 0 : index
    %11 = vector.load %arg4[%c0_9, %c0_10] : memref<1x128xf32, #tpu.memory_space<vmem>>, vector<1x128xf32>
    %12 = vector.broadcast %11 : vector<1x128xf32> to vector<8x128xf32>
    %13 = arith.addf %10, %12 : vector<8x128xf32>
    %cst_11 = arith.constant 0.000000e+00 : f32
    %14 = vector.broadcast %cst_11 : f32 to vector<8x128xf32>
    %15 = arith.maximumf %13, %14 : vector<8x128xf32>
    %16 = arith.truncf %15 : vector<8x128xf32> to vector<8x128xbf16>
    %c0_12 = arith.constant 0 : index
    %c0_13 = arith.constant 0 : index
    %17 = vector.load %arg5[%c0_12, %c0_13] : memref<128x128xbf16, #tpu.memory_space<vmem>>, vector<128x128xbf16>
    %cst_14 = arith.constant dense<0.000000e+00> : vector<8x128xf32>
    %18 = tpu.matmul %16, %17, %cst_14 {dimension_numbers = #tpu.dot_dimension_numbers<[1], [0], [0], [1], [0, 0, 1, 1], [], []>} : vector<8x128xbf16>, vector<128x128xbf16>, vector<8x128xf32> -> vector<8x128xf32>
    %c0_15 = arith.constant 0 : index
    %c0_16 = arith.constant 0 : index
    %19 = vector.load %arg6[%c0_15, %c0_16] : memref<1x128xf32, #tpu.memory_space<vmem>>, vector<1x128xf32>
    %20 = vector.broadcast %19 : vector<1x128xf32> to vector<8x128xf32>
    %21 = arith.addf %18, %20 : vector<8x128xf32>
    %c0_17 = arith.constant 0 : index
    %c0_18 = arith.constant 0 : index
    %22 = vector.load %arg7[%c0_17, %c0_18] : memref<8x128xf32, #tpu.memory_space<vmem>>, vector<8x128xf32>
    tpu.vector_store %arg7[%c0_17, %c0_18], %21 {strides = array<i32>} : memref<8x128xf32, #tpu.memory_space<vmem>>, vector<8x128xf32>,
    return
  }
}

</mosaic_0001>

<llo_original>
// kernel: speed_estimator_forward.2
$region0: #{speed_estimator_forward.2}
  #allocation0 [shape = 'u32[]', space=smem, size = 0x4, offset = 0x4, fixed_abs, tag = 'smem constant byte address 0x4 - core index']
  #allocation1 [shape = 'u32[72,128]{1,0:T(1,128)}', space=vmem, size = 0x9000, scoped, tag = 'internal scratch']
  %s0 = inlined_call_operand.vmem [shape: bf16[2,2,256,48], index: 0, kind: input, shape index: {}]
  %s1 = inlined_call_operand.vmem [shape: bf16[2,48,128], index: 1, kind: input, shape index: {}]
  %s2 = inlined_call_operand.vmem [shape: f32[2,1,128], index: 2, kind: input, shape index: {}]
  %s3 = inlined_call_operand.vmem [shape: f32[2,1,128], index: 3, kind: input, shape index: {}]
  %s4 = inlined_call_operand.vmem [shape: f32[2,1,128], index: 4, kind: input, shape index: {}]
  %s5 = inlined_call_operand.vmem [shape: f32[2,2,8,128], index: 5, kind: output, shape index: {}]
  %s6 = sld [smem:[#allocation0]]
  $region61: #{speed_estimator_forward.2} parent=0
    _
  %s8 = ssub.s32 1, %s6
  %s9 = scalar_select 0, %s8, %s6
  loop: start=0, step=1, limit=6
  $region2: #{speed_estimator_forward.2} parent=0 // loop_pre_header
    _
  $region3: #{speed_estimator_forward.2} parent=0 // loop_header
    %s11 = sphi 0, %s15
    %p12 = scmp.ge.s32.totalorder %s11, 6
    %s18 = sphi 0, %s37
    %s19 = sphi 0, %s33
    %s20 = sphi 0, %s29
    %s21 = sphi 0, %s18
    %s22 = sphi 0, %s19
    %s23 = sphi 0, %s20
    %s24 = sphi 0, %s21
    %s25 = sphi 0, %s22
    %s26 = sphi 0, %s23
    %s44 = sphi 0, %s46
    %s47 = sphi 0, %s44
    %s48 = sphi 0, %s47
    %s64 = sphi 0, %s48
    %s70 = sphi 0, %s72
    %s73 = sphi 0, %s70
    %s74 = sphi 0, %s73
    %s90 = sphi 0, %s74
    %s96 = sphi 0, %s98
    %s99 = sphi 0, %s96
    %s100 = sphi 0, %s99
    %s116 = sphi 0, %s100
    %s122 = sphi 0, %s124
    %s125 = sphi 0, %s122
    %s126 = sphi 0, %s125
    %s142 = sphi 0, %s126
    %s148 = sphi 0, %s150
    %s151 = sphi 0, %s148
    %s152 = sphi 0, %s151
    %s168 = sphi 0, %s152
    %s176 = sphi 0, %s178
    %s179 = sphi 0, %s176
    %s180 = sphi 0, %s179
    %s196 = sphi 0, %s180
  $region4: #{speed_estimator_forward.2} parent=0 // loop_header_branch
    %14 = sbr.rel (%p12) target = $region8
  $region5: #{speed_estimator_forward.2} parent=0 // loop_body
    %s16 = ssub.s32 %s11, 1
    %s17 = ssub.s32 %s11, 2
    %s27 = sadd.s32 1, %s20
    %p28 = scmp.ge.s32.totalorder %s27, 1
    %s29 = scalar_select %p28, 0, %s27
    %s30 = sadd.s32 1, %s19
    %s31 = scalar_select %p28, %s30, %s19
    %p32 = scmp.ge.s32.totalorder %s31, 2
    %s33 = scalar_select %p32, 0, %s31
    %s34 = sadd.s32 1, %s18
    %s35 = scalar_select %p32, %s34, %s18
    %p36 = scmp.ge.s32.totalorder %s35, 2
    %s37 = scalar_select %p36, 0, %s35
    %s38 = ssub.s32 %s18, %s37
    %s39 = ssub.s32 %s19, %s33
    %s40 = sor.u32 %s38, %s39
    %s41 = ssub.s32 %s20, %s29
    %s42 = sor.u32 %s40, %s41
    %p43 = scmp.eq.s32.totalorder %s42, 0
    %s45 = sadd.s32 %s44, 1
    %s46 = scalar_select %p43, %s44, %s45
    %p49 = pneg %p43
    %p50 = scmp.eq.s32.totalorder %s11, 3
    %p51 = por %p49, %p50
    %p52 = scmp.ne.s32.totalorder %s44, %s47
    %p53 = scmp.eq.s32.totalorder %s11, 0
    %p54 = por %p52, %p53
    %p55 = scmp.ne.s32.totalorder %s44, %s47
    %p56 = scmp.eq.s32.totalorder %s16, 3
    %p57 = por %p55, %p56
    %p58 = scmp.ne.s32.totalorder %s47, %s48
    %p59 = scmp.eq.s32.totalorder %s16, 0
    %p60 = por %p58, %p59
    %p61 = scmp.ne.s32.totalorder %s47, %s48
    %p62 = scmp.eq.s32.totalorder %s17, 3
    %p63 = por %p61, %p62
    %p65 = scmp.ne.s32.totalorder %s48, %s64
    %p66 = scmp.eq.s32.totalorder %s17, 0
    %p67 = por %p65, %p66
    %s68 = ssub.s32 %s18, %s37
    %p69 = scmp.eq.s32.totalorder %s68, 0
    %s71 = sadd.s32 %s70, 1
    %s72 = scalar_select %p69, %s70, %s71
    %p75 = pneg %p69
    %p76 = scmp.eq.s32.totalorder %s11, 3
    %p77 = por %p75, %p76
    %p78 = scmp.ne.s32.totalorder %s70, %s73
    %p79 = scmp.eq.s32.totalorder %s11, 0
    %p80 = por %p78, %p79
    %p81 = scmp.ne.s32.totalorder %s70, %s73
    %p82 = scmp.eq.s32.totalorder %s16, 3
    %p83 = por %p81, %p82
    %p84 = scmp.ne.s32.totalorder %s73, %s74
    %p85 = scmp.eq.s32.totalorder %s16, 0
    %p86 = por %p84, %p85
    %p87 = scmp.ne.s32.totalorder %s73, %s74
    %p88 = scmp.eq.s32.totalorder %s17, 3
    %p89 = por %p87, %p88
    %p91 = scmp.ne.s32.totalorder %s74, %s90
    %p92 = scmp.eq.s32.totalorder %s17, 0
    %p93 = por %p91, %p92
    %s94 = ssub.s32 %s18, %s37
    %p95 = scmp.eq.s32.totalorder %s94, 0
    %s97 = sadd.s32 %s96, 1
    %s98 = scalar_select %p95, %s96, %s97
    %p101 = pneg %p95
    %p102 = scmp.eq.s32.totalorder %s11, 3
    %p103 = por %p101, %p102
    %p104 = scmp.ne.s32.totalorder %s96, %s99
    %p105 = scmp.eq.s32.totalorder %s11, 0
    %p106 = por %p104, %p105
    %p107 = scmp.ne.s32.totalorder %s96, %s99
    %p108 = scmp.eq.s32.totalorder %s16, 3
    %p109 = por %p107, %p108
    %p110 = scmp.ne.s32.totalorder %s99, %s100
    %p111 = scmp.eq.s32.totalorder %s16, 0
    %p112 = por %p110, %p111
    %p113 = scmp.ne.s32.totalorder %s99, %s100
    %p114 = scmp.eq.s32.totalorder %s17, 3
    %p115 = por %p113, %p114
    %p117 = scmp.ne.s32.totalorder %s100, %s116
    %p118 = scmp.eq.s32.totalorder %s17, 0
    %p119 = por %p117, %p118
    %s120 = ssub.s32 %s18, %s37
    %p121 = scmp.eq.s32.totalorder %s120, 0
    %s123 = sadd.s32 %s122, 1
    %s124 = scalar_select %p121, %s122, %s123
    %p127 = pneg %p121
    %p128 = scmp.eq.s32.totalorder %s11, 3
    %p129 = por %p127, %p128
    %p130 = scmp.ne.s32.totalorder %s122, %s125
    %p131 = scmp.eq.s32.totalorder %s11, 0
    %p132 = por %p130, %p131
    %p133 = scmp.ne.s32.totalorder %s122, %s125
    %p134 = scmp.eq.s32.totalorder %s16, 3
    %p135 = por %p133, %p134
    %p136 = scmp.ne.s32.totalorder %s125, %s126
    %p137 = scmp.eq.s32.totalorder %s16, 0
    %p138 = por %p136, %p137
    %p139 = scmp.ne.s32.totalorder %s125, %s126
    %p140 = scmp.eq.s32.totalorder %s17, 3
    %p141 = por %p139, %p140
    %p143 = scmp.ne.s32.totalorder %s126, %s142
    %p144 = scmp.eq.s32.totalorder %s17, 0
    %p145 = por %p143, %p144
    %s146 = ssub.s32 %s18, %s37
    %p147 = scmp.eq.s32.totalorder %s146, 0
    %s149 = sadd.s32 %s148, 1
    %s150 = scalar_select %p147, %s148, %s149
    %p153 = pneg %p147
    %p154 = scmp.eq.s32.totalorder %s11, 3
    %p155 = por %p153, %p154
    %p156 = scmp.ne.s32.totalorder %s148, %s151
    %p157 = scmp.eq.s32.totalorder %s11, 0
    %p158 = por %p156, %p157
    %p159 = scmp.ne.s32.totalorder %s148, %s151
    %p160 = scmp.eq.s32.totalorder %s16, 3
    %p161 = por %p159, %p160
    %p162 = scmp.ne.s32.totalorder %s151, %s152
    %p163 = scmp.eq.s32.totalorder %s16, 0
    %p164 = por %p162, %p163
    %p165 = scmp.ne.s32.totalorder %s151, %s152
    %p166 = scmp.eq.s32.totalorder %s17, 3
    %p167 = por %p165, %p166
    %p169 = scmp.ne.s32.totalorder %s152, %s168
    %p170 = scmp.eq.s32.totalorder %s17, 0
    %p171 = por %p169, %p170
    %s172 = ssub.s32 %s18, %s37
    %s173 = ssub.s32 %s19, %s33
    %s174 = sor.u32 %s172, %s173
    %p175 = scmp.eq.s32.totalorder %s174, 0
    %s177 = sadd.s32 %s176, 1
    %s178 = scalar_select %p175, %s176, %s177
    %p181 = pneg %p175
    %p182 = scmp.eq.s32.totalorder %s11, 3
    %p183 = por %p181, %p182
    %p184 = scmp.ne.s32.totalorder %s176, %s179
    %p185 = scmp.eq.s32.totalorder %s11, 0
    %p186 = por %p184, %p185
    %p187 = scmp.ne.s32.totalorder %s176, %s179
    %p188 = scmp.eq.s32.totalorder %s16, 3
    %p189 = por %p187, %p188
    %p190 = scmp.ne.s32.totalorder %s179, %s180
    %p191 = scmp.eq.s32.totalorder %s16, 0
    %p192 = por %p190, %p191
    %p193 = scmp.ne.s32.totalorder %s179, %s180
    %p194 = scmp.eq.s32.totalorder %s17, 3
    %p195 = por %p193, %p194
    %p197 = scmp.ne.s32.totalorder %s180, %s196
    %p198 = scmp.eq.s32.totalorder %s17, 0
    %p199 = por %p197, %p198
    %p200 = scmp.le.s32.totalorder 1, %s11
    %p201 = scmp.lt.s32.totalorder %s11, 5
    %p202 = pnand %p200, %p201
    %p203 = pneg %p202
    // Predicated region
    $region9: #{speed_estimator_forward.2} parent=5 // pred_check
      _
    $region10: #{speed_estimator_forward.2} parent=5 // pred_check_branch
      %205 = sbr.rel (%p202) target = $region12
    $region11: #{speed_estimator_forward.2} parent=5 // pred_region
      %s206 = ssub.s32 %s11, 1
    $region12: #{speed_estimator_forward.2} parent=5 // pred_fallthru
      _
    %p207 = scmp.lt.s32.totalorder %s11, 4
    // Predicated region
    $region13: #{speed_estimator_forward.2} parent=5 // pred_check
      %p208 = pneg %p207
    $region14: #{speed_estimator_forward.2} parent=5 // pred_check_branch
      %210 = sbr.rel (%p208) target = $region16
    $region15: #{speed_estimator_forward.2} parent=5 // pred_region
      // Predicated region
      $region17: #{speed_estimator_forward.2} parent=15 // pred_check
        %p211 = pneg %p54
      $region18: #{speed_estimator_forward.2} parent=15 // pred_check_branch
        %213 = sbr.rel (%p211) target = $region20
      $region19: #{speed_estimator_forward.2} parent=15 // pred_region
        %s214 = smul.u32 32, %s20
        %p215 = scmp.lt.s32.totalorder %s18, 1
        %s216 = scalar_select %p215, %s18, 1
        %p217 = scmp.lt.s32.totalorder %s19, 1
        %s218 = scalar_select %p217, %s19, 1
        %p219 = scmp.lt.s32.totalorder %s214, 31
        %s220 = scalar_select %p219, %s214, 31
        %s221 = smul.addr %s218, 32
        %s222 = sadd.s32 %s220, %s221
        %s223 = smul.addr %s216, 64
        %s224 = sadd.s32 %s222, %s223
        %s225 = smul.addr %s224, 4
        %s226 = scalar_lea.vmem %s0, %s225
        %s227 = smul.u32 32, %s20
      $region20: #{speed_estimator_forward.2} parent=15 // pred_fallthru
        _
      // Predicated region
      $region21: #{speed_estimator_forward.2} parent=15 // pred_check
        %p228 = pneg %p80
      $region22: #{speed_estimator_forward.2} parent=15 // pred_check_branch
        %230 = sbr.rel (%p228) target = $region24
      $region23: #{speed_estimator_forward.2} parent=15 // pred_region
        %p231 = scmp.lt.s32.totalorder %s18, 1
        %s232 = scalar_select %p231, %s18, 1
        %s233 = smul.addr %s232, 6
        %s234 = smul.addr %s233, 4
        %s235 = scalar_lea.vmem %s1, %s234
      $region24: #{speed_estimator_forward.2} parent=15 // pred_fallthru
        _
      // Predicated region
      $region25: #{speed_estimator_forward.2} parent=15 // pred_check
        %p236 = pneg %p106
      $region26: #{speed_estimator_forward.2} parent=15 // pred_check_branch
        %238 = sbr.rel (%p236) target = $region28
      $region27: #{speed_estimator_forward.2} parent=15 // pred_region
        %p239 = scmp.lt.s32.totalorder %s18, 1
        %s240 = scalar_select %p239, %s18, 1
        %s241 = scalar_lea.vmem %s2, %s240
      $region28: #{speed_estimator_forward.2} parent=15 // pred_fallthru
        _
      // Predicated region
      $region29: #{speed_estimator_forward.2} parent=15 // pred_check
        %p242 = pneg %p132
      $region30: #{speed_estimator_forward.2} parent=15 // pred_check_branch
        %244 = sbr.rel (%p242) target = $region32
      $region31: #{speed_estimator_forward.2} parent=15 // pred_region
        %p245 = scmp.lt.s32.totalorder %s18, 1
        %s246 = scalar_select %p245, %s18, 1
        %s247 = scalar_lea.vmem %s3, %s246
      $region32: #{speed_estimator_forward.2} parent=15 // pred_fallthru
        _
      // Predicated region
      $region33: #{speed_estimator_forward.2} parent=15 // pred_check
        %p248 = pneg %p158
      $region34: #{speed_estimator_forward.2} parent=15 // pred_check_branch
        %250 = sbr.rel (%p248) target = $region36
      $region35: #{speed_estimator_forward.2} parent=15 // pred_region
        %p251 = scmp.lt.s32.totalorder %s18, 1
        %s252 = scalar_select %p251, %s18, 1
        %s253 = scalar_lea.vmem %s4, %s252
      $region36: #{speed_estimator_forward.2} parent=15 // pred_fallthru
        _
    $region16: #{speed_estimator_forward.2} parent=5 // pred_fallthru
      _
    %p254 = scmp.le.s32.totalorder 1, %s11
    %p255 = scmp.lt.s32.totalorder %s11, 5
    %p256 = pnand %p254, %p255
    %p257 = pneg %p256
    // Predicated region
    $region37: #{speed_estimator_forward.2} parent=5 // pred_check
      _
    $region38: #{speed_estimator_forward.2} parent=5 // pred_check_branch
      %259 = sbr.rel (%p256) target = $region40
    $region39: #{speed_estimator_forward.2} parent=5 // pred_region
      %s260 = ssub.s32 %s11, 1
      %s261 = smul.u32 32, %s23
      %p262 = scmp.lt.s32.totalorder %s21, 1
      %s263 = scalar_select %p262, %s21, 1
      %p264 = scmp.lt.s32.totalorder %s22, 1
      %s265 = scalar_select %p264, %s22, 1
      %p266 = scmp.lt.s32.totalorder %s261, 31
      %s267 = scalar_select %p266, %s261, 31
      %s268 = smul.addr %s265, 32
      %s269 = sadd.s32 %s267, %s268
      %s270 = smul.addr %s263, 64
      %s271 = sadd.s32 %s269, %s270
      %s272 = smul.addr %s271, 4
      %s273 = scalar_lea.vmem %s0, %s272
      %p274 = pneg %p60
      %p275 = pneg %p57
      %p276 = scmp.lt.s32.totalorder %s21, 1
      %s277 = scalar_select %p276, %s21, 1
      %s278 = smul.addr %s277, 6
      %s279 = smul.addr %s278, 4
      %s280 = scalar_lea.vmem %s1, %s279
      %p281 = pneg %p86
      %p282 = pneg %p83
      %p283 = scmp.lt.s32.totalorder %s21, 1
      %s284 = scalar_select %p283, %s21, 1
      %s285 = scalar_lea.vmem %s2, %s284
      %p286 = pneg %p112
      %p287 = pneg %p109
      %p288 = scmp.lt.s32.totalorder %s21, 1
      %s289 = scalar_select %p288, %s21, 1
      %s290 = scalar_lea.vmem %s3, %s289
      %p291 = pneg %p138
      %p292 = pneg %p135
      %p293 = scmp.lt.s32.totalorder %s21, 1
      %s294 = scalar_select %p293, %s21, 1
      %s295 = scalar_lea.vmem %s4, %s294
      %p296 = pneg %p164
      %p297 = pneg %p161
      %p298 = pneg %p192
      %p299 = pneg %p189
      %p300 = scmp.lt.s32.totalorder %s21, 1
      %s301 = scalar_select %p300, %s21, 1
      %p302 = scmp.lt.s32.totalorder %s22, 1
      %s303 = scalar_select %p302, %s22, 1
      %s304 = smul.addr %s301, 2
      %s305 = sadd.s32 %s303, %s304
      %s306 = smul.addr %s305, 8
      %s307 = scalar_lea.vmem %s5, %s306
      %s308 = smul.u32 32, %s23
      %p309 = scmp.lt.s32.totalorder %s21, 1
      %s310 = scalar_select %p309, %s21, 1
      %p311 = scmp.lt.s32.totalorder %s22, 1
      %s312 = scalar_select %p311, %s22, 1
      %p313 = scmp.lt.s32.totalorder %s308, 31
      %s314 = scalar_select %p313, %s308, 31
      %s315 = smul.addr %s312, 32
      %s316 = sadd.s32 %s314, %s315
      %s317 = smul.addr %s310, 64
      %s318 = sadd.s32 %s316, %s317
      %s319 = smul.addr %s318, 4
      %s320 = scalar_lea.vmem %s0, %s319
      %s321 = smul.u32 32, %s23
      %p322 = scmp.lt.s32.totalorder %s21, 1
      %s323 = scalar_select %p322, %s21, 1
      %s324 = smul.addr %s323, 6
      %s325 = smul.addr %s324, 4
      %s326 = scalar_lea.vmem %s1, %s325
      %p327 = scmp.lt.s32.totalorder %s21, 1
      %s328 = scalar_select %p327, %s21, 1
      %s329 = scalar_lea.vmem %s2, %s328
      %p330 = scmp.lt.s32.totalorder %s21, 1
      %s331 = scalar_select %p330, %s21, 1
      %s332 = scalar_lea.vmem %s3, %s331
      %p333 = scmp.lt.s32.totalorder %s21, 1
      %s334 = scalar_select %p333, %s21, 1
      %s335 = scalar_lea.vmem %s4, %s334
      %p336 = scmp.lt.s32.totalorder %s21, 1
      %s337 = scalar_select %p336, %s21, 1
      %p338 = scmp.lt.s32.totalorder %s22, 1
      %s339 = scalar_select %p338, %s22, 1
      %s340 = smul.addr %s337, 2
      %s341 = sadd.s32 %s339, %s340
      %s342 = smul.addr %s341, 8
      %s343 = scalar_lea.vmem %s5, %s342
      %p345 = scmp.eq.s32.totalorder %s23, 0
      // Predicated region
      $region41: #{speed_estimator_forward.2} parent=39 // pred_check
        %p346 = pneg %p345
      $region42: #{speed_estimator_forward.2} parent=39 // pred_check_branch
        %348 = sbr.rel (%p346) target = $region44
      $region43: #{speed_estimator_forward.2} parent=39 // pred_region
        %349 = vst [vmem:[%s343] sm:$0xff] 0.0
      $region44: #{speed_estimator_forward.2} parent=39 // pred_fallthru
        _
      %v350 = vld [vmem:[%s320] sm:$0xf]
      %v351 = vld [vmem:[%s320 + $0x4] sm:$0xf]
      %v352 = vld [vmem:[%s320 + $0x8] sm:$0xf]
      %v353 = vld [vmem:[%s320 + $0xc] sm:$0xf]
      %v354 = vld [vmem:[%s320 + $0x10] sm:$0xf]
      %v355 = vld [vmem:[%s320 + $0x14] sm:$0xf]
      %v356 = vld [vmem:[%s320 + $0x18] sm:$0xf]
      %v357 = vld [vmem:[%s320 + $0x1c] sm:$0xf]
      %v358 = vld [vmem:[%s320 + $0x20] sm:$0xf]
      %v359 = vld [vmem:[%s320 + $0x24] sm:$0xf]
      %v360 = vld [vmem:[%s320 + $0x28] sm:$0xf]
      %v361 = vld [vmem:[%s320 + $0x2c] sm:$0xf]
      %v362 = vld [vmem:[%s320 + $0x30] sm:$0xf]
      %v363 = vld [vmem:[%s320 + $0x34] sm:$0xf]
      %v364 = vld [vmem:[%s320 + $0x38] sm:$0xf]
      %v365 = vld [vmem:[%s320 + $0x3c] sm:$0xf]
      %v366 = vld [vmem:[%s320 + $0x40] sm:$0xf]
      %v367 = vld [vmem:[%s320 + $0x44] sm:$0xf]
      %v368 = vld [vmem:[%s320 + $0x48] sm:$0xf]
      %v369 = vld [vmem:[%s320 + $0x4c] sm:$0xf]
      %v370 = vld [vmem:[%s320 + $0x50] sm:$0xf]
      %v371 = vld [vmem:[%s320 + $0x54] sm:$0xf]
      %v372 = vld [vmem:[%s320 + $0x58] sm:$0xf]
      %v373 = vld [vmem:[%s320 + $0x5c] sm:$0xf]
      %v374 = vld [vmem:[%s320 + $0x60] sm:$0xf]
      %v375 = vld [vmem:[%s320 + $0x64] sm:$0xf]
      %v376 = vld [vmem:[%s320 + $0x68] sm:$0xf]
      %v377 = vld [vmem:[%s320 + $0x6c] sm:$0xf]
      %v378 = vld [vmem:[%s320 + $0x70] sm:$0xf]
      %v379 = vld [vmem:[%s320 + $0x74] sm:$0xf]
      %v380 = vld [vmem:[%s320 + $0x78] sm:$0xf]
      %v381 = vld [vmem:[%s320 + $0x7c] sm:$0xf]
      %v382 = vld [vmem:[%s326] sm:$0xf]
      %v383 = vld [vmem:[%s326 + $0x4] sm:$0xf]
      %v384 = vld [vmem:[%s326 + $0x8] sm:$0xf]
      %v385 = vld [vmem:[%s326 + $0xc] sm:$0xf]
      %v386 = vld [vmem:[%s326 + $0x10] sm:$0xf]
      %v387 = vld [vmem:[%s326 + $0x14] sm:$0xf]
      %v388 = vld [vmem:[%s329] sm:$0x1]
      %v390 = vperm.slane %v388, 0
      %v424 = vunpack.c.l.b16 %v350
      %v425 = vunpack.c.l.b16 %v351
      %v426 = vunpack.c.l.b16 %v352
      %v427 = vunpack.c.l.b16 %v353
      %v428 = vunpack.c.l.b16 %v354
      %v429 = vunpack.c.l.b16 %v355
      %v430 = vunpack.c.l.b16 %v356
      %v431 = vunpack.c.l.b16 %v357
      %v432 = vunpack.c.l.b16 %v358
      %v433 = vunpack.c.l.b16 %v359
      %v434 = vunpack.c.l.b16 %v360
      %v435 = vunpack.c.l.b16 %v361
      %v436 = vunpack.c.l.b16 %v362
      %v437 = vunpack.c.l.b16 %v363
      %v438 = vunpack.c.l.b16 %v364
      %v439 = vunpack.c.l.b16 %v365
      %v440 = vunpack.c.l.b16 %v366
      %v441 = vunpack.c.l.b16 %v367
      %v442 = vunpack.c.l.b16 %v368
      %v443 = vunpack.c.l.b16 %v369
      %v444 = vunpack.c.l.b16 %v370
      %v445 = vunpack.c.l.b16 %v371
      %v446 = vunpack.c.l.b16 %v372
      %v447 = vunpack.c.l.b16 %v373
      %v448 = vunpack.c.l.b16 %v374
      %v449 = vunpack.c.l.b16 %v375
      %v450 = vunpack.c.l.b16 %v376
      %v451 = vunpack.c.l.b16 %v377
      %v452 = vunpack.c.l.b16 %v378
      %v453 = vunpack.c.l.b16 %v379
      %v454 = vunpack.c.l.b16 %v380
      %v455 = vunpack.c.l.b16 %v381
      %v456 = vpack.c.b16 %v425, %v424
      %v457 = vpack.c.b16 %v427, %v426
      %v458 = vpack.c.b16 %v429, %v428
      %v459 = vpack.c.b16 %v431, %v430
      %v460 = vpack.c.b16 %v433, %v432
      %v461 = vpack.c.b16 %v435, %v434
      %v462 = vpack.c.b16 %v437, %v436
      %v463 = vpack.c.b16 %v439, %v438
      %v464 = vpack.c.b16 %v441, %v440
      %v465 = vpack.c.b16 %v443, %v442
      %v466 = vpack.c.b16 %v445, %v444
      %v467 = vpack.c.b16 %v447, %v446
      %v468 = vpack.c.b16 %v449, %v448
      %v469 = vpack.c.b16 %v451, %v450
      %v470 = vpack.c.b16 %v453, %v452
      %v471 = vpack.c.b16 %v455, %v454
      %v478 = vunpack.c.l.b16 %v382
      %v479 = vunpack.c.l.b16 %v383
      %v480 = vunpack.c.l.b16 %v384
      %v481 = vunpack.c.l.b16 %v385
      %v482 = vunpack.c.l.b16 %v386
      %v483 = vunpack.c.l.b16 %v387
      %v484 = vpack.c.b16 %v479, %v478
      %v485 = vpack.c.b16 %v481, %v480
      %v486 = vpack.c.b16 %v483, %v482
      %vm490 = vcmask 392192
      %v492 = vsel %vm490, %v456, 0
      %v495 = vsel %vm490, %v457, 0
      %v498 = vsel %vm490, %v458, 0
      %v501 = vsel %vm490, %v459, 0
      %v504 = vsel %vm490, %v460, 0
      %v507 = vsel %vm490, %v461, 0
      %v510 = vsel %vm490, %v462, 0
      %v513 = vsel %vm490, %v463, 0
      %v516 = vsel %vm490, %v464, 0
      %v519 = vsel %vm490, %v465, 0
      %v522 = vsel %vm490, %v466, 0
      %v525 = vsel %vm490, %v467, 0
      %v528 = vsel %vm490, %v468, 0
      %v531 = vsel %vm490, %v469, 0
      %v534 = vsel %vm490, %v470, 0
      %v537 = vsel %vm490, %v471, 0
      %539 = vmatpush.bf16.msra.mxu0 0
      %540 = vmatpush.bf16.msra.mxu0 0
      %541 = vmatpush.bf16.msra.mxu0 0
      %542 = vmatpush.bf16.msra.mxu0 0
      %543 = vmatpush.bf16.msra.mxu0 0
      %544 = vmatpush.bf16.msra.mxu0 %v486
      %545 = vmatpush.bf16.msra.mxu0 %v485
      %546 = vmatpush.bf16.msra.mxu0 %v484
      %547 = vmatmul.bf16.gmra.mxu0 %v492
      %v548 = vpop.f32.mrf.mxu0
      %v549 = vadd.f32 %v390, %v548
      %v550 = vpop.f32.mrf.mxu0
      %v551 = vadd.f32 %v390, %v550
      %552 = vmatmul.bf16.gmra.mxu0 %v495
      %v553 = vpop.f32.mrf.mxu0
      %v554 = vadd.f32 %v390, %v553
      %v555 = vpop.f32.mrf.mxu0
      %v556 = vadd.f32 %v390, %v555
      %557 = vmatmul.bf16.gmra.mxu0 %v498
      %v558 = vpop.f32.mrf.mxu0
      %v559 = vadd.f32 %v390, %v558
      %v560 = vpop.f32.mrf.mxu0
      %v561 = vadd.f32 %v390, %v560
      %562 = vmatmul.bf16.gmra.mxu0 %v501
      %v563 = vpop.f32.mrf.mxu0
      %v564 = vadd.f32 %v390, %v563
      %v565 = vpop.f32.mrf.mxu0
      %v566 = vadd.f32 %v390, %v565
      %567 = vmatmul.bf16.gmra.mxu0 %v504
      %v568 = vpop.f32.mrf.mxu0
      %v569 = vadd.f32 %v390, %v568
      %v570 = vpop.f32.mrf.mxu0
      %v571 = vadd.f32 %v390, %v570
      %572 = vmatmul.bf16.gmra.mxu0 %v507
      %v573 = vpop.f32.mrf.mxu0
      %v574 = vadd.f32 %v390, %v573
      %v575 = vpop.f32.mrf.mxu0
      %v576 = vadd.f32 %v390, %v575
      %577 = vmatmul.bf16.gmra.mxu0 %v510
      %v578 = vpop.f32.mrf.mxu0
      %v579 = vadd.f32 %v390, %v578
      %v580 = vpop.f32.mrf.mxu0
      %v581 = vadd.f32 %v390, %v580
      %582 = vmatmul.bf16.gmra.mxu0 %v513
      %v583 = vpop.f32.mrf.mxu0
      %v584 = vadd.f32 %v390, %v583
      %v585 = vpop.f32.mrf.mxu0
      %v586 = vadd.f32 %v390, %v585
      %587 = vmatmul.bf16.gmra.mxu0 %v516
      %v588 = vpop.f32.mrf.mxu0
      %v589 = vadd.f32 %v390, %v588
      %v590 = vpop.f32.mrf.mxu0
      %v591 = vadd.f32 %v390, %v590
      %592 = vmatmul.bf16.gmra.mxu0 %v519
      %v593 = vpop.f32.mrf.mxu0
      %v594 = vadd.f32 %v390, %v593
      %v595 = vpop.f32.mrf.mxu0
      %v596 = vadd.f32 %v390, %v595
      %597 = vmatmul.bf16.gmra.mxu0 %v522
      %v598 = vpop.f32.mrf.mxu0
      %v599 = vadd.f32 %v390, %v598
      %v600 = vpop.f32.mrf.mxu0
      %v601 = vadd.f32 %v390, %v600
      %602 = vmatmul.bf16.gmra.mxu0 %v525
      %v603 = vpop.f32.mrf.mxu0
      %v604 = vadd.f32 %v390, %v603
      %v605 = vpop.f32.mrf.mxu0
      %v606 = vadd.f32 %v390, %v605
      %607 = vmatmul.bf16.gmra.mxu0 %v528
      %v608 = vpop.f32.mrf.mxu0
      %v609 = vadd.f32 %v390, %v608
      %v610 = vpop.f32.mrf.mxu0
      %v611 = vadd.f32 %v390, %v610
      %612 = vmatmul.bf16.gmra.mxu0 %v531
      %v613 = vpop.f32.mrf.mxu0
      %v614 = vadd.f32 %v390, %v613
      %v615 = vpop.f32.mrf.mxu0
      %v616 = vadd.f32 %v390, %v615
      %617 = vmatmul.bf16.gmra.mxu0 %v534
      %v618 = vpop.f32.mrf.mxu0
      %v619 = vadd.f32 %v390, %v618
      %v620 = vpop.f32.mrf.mxu0
      %v621 = vadd.f32 %v390, %v620
      %622 = vmatmul.bf16.gmra.mxu0 %v537
      %v623 = vpop.f32.mrf.mxu0
      %v624 = vadd.f32 %v390, %v623
      %v625 = vpop.f32.mrf.mxu0
      %v626 = vadd.f32 %v390, %v625
      %627 = vdwg.mxu0
      %628 = vadd.xlane.f32.xlu0 %v549
      %v629 = vpop.xlane.xlu0 %628
      %630 = vadd.xlane.f32.xlu0 %v551
      %v631 = vpop.xlane.xlu0 %630
      %632 = vadd.xlane.f32.xlu0 %v554
      %v633 = vpop.xlane.xlu0 %632
      %634 = vadd.xlane.f32.xlu0 %v556
      %v635 = vpop.xlane.xlu0 %634
      %636 = vadd.xlane.f32.xlu0 %v559
      %v637 = vpop.xlane.xlu0 %636
      %638 = vadd.xlane.f32.xlu0 %v561
      %v639 = vpop.xlane.xlu0 %638
      %640 = vadd.xlane.f32.xlu0 %v564
      %v641 = vpop.xlane.xlu0 %640
      %642 = vadd.xlane.f32.xlu0 %v566
      %v643 = vpop.xlane.xlu0 %642
      %644 = vadd.xlane.f32.xlu0 %v569
      %v645 = vpop.xlane.xlu0 %644
      %646 = vadd.xlane.f32.xlu0 %v571
      %v647 = vpop.xlane.xlu0 %646
      %648 = vadd.xlane.f32.xlu0 %v574
      %v649 = vpop.xlane.xlu0 %648
      %650 = vadd.xlane.f32.xlu0 %v576
      %v651 = vpop.xlane.xlu0 %650
      %652 = vadd.xlane.f32.xlu0 %v579
      %v653 = vpop.xlane.xlu0 %652
      %654 = vadd.xlane.f32.xlu0 %v581
      %v655 = vpop.xlane.xlu0 %654
      %656 = vadd.xlane.f32.xlu0 %v584
      %v657 = vpop.xlane.xlu0 %656
      %658 = vadd.xlane.f32.xlu0 %v586
      %v659 = vpop.xlane.xlu0 %658
      %660 = vadd.xlane.f32.xlu0 %v589
      %v661 = vpop.xlane.xlu0 %660
      %662 = vadd.xlane.f32.xlu0 %v591
      %v663 = vpop.xlane.xlu0 %662
      %664 = vadd.xlane.f32.xlu0 %v594
      %v665 = vpop.xlane.xlu0 %664
      %666 = vadd.xlane.f32.xlu0 %v596
      %v667 = vpop.xlane.xlu0 %666
      %668 = vadd.xlane.f32.xlu0 %v599
      %v669 = vpop.xlane.xlu0 %668
      %670 = vadd.xlane.f32.xlu0 %v601
      %v671 = vpop.xlane.xlu0 %670
      %672 = vadd.xlane.f32.xlu0 %v604
      %v673 = vpop.xlane.xlu0 %672
      %674 = vadd.xlane.f32.xlu0 %v606
      %v675 = vpop.xlane.xlu0 %674
      %676 = vadd.xlane.f32.xlu0 %v609
      %v677 = vpop.xlane.xlu0 %676
      %678 = vadd.xlane.f32.xlu0 %v611
      %v679 = vpop.xlane.xlu0 %678
      %680 = vadd.xlane.f32.xlu0 %v614
      %v681 = vpop.xlane.xlu0 %680
      %682 = vadd.xlane.f32.xlu0 %v616
      %v683 = vpop.xlane.xlu0 %682
      %684 = vadd.xlane.f32.xlu0 %v619
      %v685 = vpop.xlane.xlu0 %684
      %686 = vadd.xlane.f32.xlu0 %v621
      %v687 = vpop.xlane.xlu0 %686
      %688 = vadd.xlane.f32.xlu0 %v624
      %v689 = vpop.xlane.xlu0 %688
      %690 = vadd.xlane.f32.xlu0 %v626
      %v691 = vpop.xlane.xlu0 %690
      %v692 = vrcp.pop 128.0
      %v693 = vmul.f32 128.0, %v692
      %v694 = vsub.f32 1.0, %v693
      %v695 = vmul.f32 %v692, %v694
      %v696 = vadd.f32 %v692, %v695
      %vm697 = vweird.f32 %v692
      %v698 = vsel %vm697, %v692, %v696
      %v699 = vmul.f32 %v629, %v698
      %v700 = vmul.f32 %v631, %v698
      %v701 = vmul.f32 %v633, %v698
      %v702 = vmul.f32 %v635, %v698
      %v703 = vmul.f32 %v637, %v698
      %v704 = vmul.f32 %v639, %v698
      %v705 = vmul.f32 %v641, %v698
      %v706 = vmul.f32 %v643, %v698
      %v707 = vmul.f32 %v645, %v698
      %v708 = vmul.f32 %v647, %v698
      %v709 = vmul.f32 %v649, %v698
      %v710 = vmul.f32 %v651, %v698
      %v711 = vmul.f32 %v653, %v698
      %v712 = vmul.f32 %v655, %v698
      %v713 = vmul.f32 %v657, %v698
      %v714 = vmul.f32 %v659, %v698
      %v715 = vmul.f32 %v661, %v698
      %v716 = vmul.f32 %v663, %v698
      %v717 = vmul.f32 %v665, %v698
      %v718 = vmul.f32 %v667, %v698
      %v719 = vmul.f32 %v669, %v698
      %v720 = vmul.f32 %v671, %v698
      %v721 = vmul.f32 %v673, %v698
      %v722 = vmul.f32 %v675, %v698
      %v723 = vmul.f32 %v677, %v698
      %v724 = vmul.f32 %v679, %v698
      %v725 = vmul.f32 %v681, %v698
      %v726 = vmul.f32 %v683, %v698
      %v727 = vmul.f32 %v685, %v698
      %v728 = vmul.f32 %v687, %v698
      %v729 = vmul.f32 %v689, %v698
      %v730 = vmul.f32 %v691, %v698
      %v731 = vsub.f32 %v549, %v699
      %v732 = vsub.f32 %v551, %v700
      %v733 = vsub.f32 %v554, %v701
      %v734 = vsub.f32 %v556, %v702
      %v735 = vsub.f32 %v559, %v703
      %v736 = vsub.f32 %v561, %v704
      %v737 = vsub.f32 %v564, %v705
      %v738 = vsub.f32 %v566, %v706
      %v739 = vsub.f32 %v569, %v707
      %v740 = vsub.f32 %v571, %v708
      %v741 = vsub.f32 %v574, %v709
      %v742 = vsub.f32 %v576, %v710
      %v743 = vsub.f32 %v579, %v711
      %v744 = vsub.f32 %v581, %v712
      %v745 = vsub.f32 %v584, %v713
      %v746 = vsub.f32 %v586, %v714
      %v747 = vsub.f32 %v589, %v715
      %v748 = vsub.f32 %v591, %v716
      %v749 = vsub.f32 %v594, %v717
      %v750 = vsub.f32 %v596, %v718
      %v751 = vsub.f32 %v599, %v719
      %v752 = vsub.f32 %v601, %v720
      %v753 = vsub.f32 %v604, %v721
      %v754 = vsub.f32 %v606, %v722
      %v755 = vsub.f32 %v609, %v723
      %v756 = vsub.f32 %v611, %v724
      %v757 = vsub.f32 %v614, %v725
      %v758 = vsub.f32 %v616, %v726
      %v759 = vsub.f32 %v619, %v727
      %v760 = vsub.f32 %v621, %v728
      %v761 = vsub.f32 %v624, %v729
      %v762 = vsub.f32 %v626, %v730
      %v763 = vmul.f32 %v731, %v731
      %v764 = vmul.f32 %v732, %v732
      %v765 = vmul.f32 %v733, %v733
      %v766 = vmul.f32 %v734, %v734
      %v767 = vmul.f32 %v735, %v735
      %v768 = vmul.f32 %v736, %v736
      %v769 = vmul.f32 %v737, %v737
      %v770 = vmul.f32 %v738, %v738
      %v771 = vmul.f32 %v739, %v739
      %v772 = vmul.f32 %v740, %v740
      %v773 = vmul.f32 %v741, %v741
      %v774 = vmul.f32 %v742, %v742
      %v775 = vmul.f32 %v743, %v743
      %v776 = vmul.f32 %v744, %v744
      %v777 = vmul.f32 %v745, %v745
      %v778 = vmul.f32 %v746, %v746
      %v779 = vmul.f32 %v747, %v747
      %v780 = vmul.f32 %v748, %v748
      %v781 = vmul.f32 %v749, %v749
      %v782 = vmul.f32 %v750, %v750
      %v783 = vmul.f32 %v751, %v751
      %v784 = vmul.f32 %v752, %v752
      %v785 = vmul.f32 %v753, %v753
      %v786 = vmul.f32 %v754, %v754
      %v787 = vmul.f32 %v755, %v755
      %v788 = vmul.f32 %v756, %v756
      %v789 = vmul.f32 %v757, %v757
      %v790 = vmul.f32 %v758, %v758
      %v791 = vmul.f32 %v759, %v759
      %v792 = vmul.f32 %v760, %v760
      %v793 = vmul.f32 %v761, %v761
      %v794 = vmul.f32 %v762, %v762
      %795 = vadd.xlane.f32.xlu0 %v763
      %v796 = vpop.xlane.xlu0 %795
      %797 = vadd.xlane.f32.xlu0 %v764
      %v798 = vpop.xlane.xlu0 %797
      %799 = vadd.xlane.f32.xlu0 %v765
      %v800 = vpop.xlane.xlu0 %799
      %801 = vadd.xlane.f32.xlu0 %v766
      %v802 = vpop.xlane.xlu0 %801
      %803 = vadd.xlane.f32.xlu0 %v767
      %v804 = vpop.xlane.xlu0 %803
      %805 = vadd.xlane.f32.xlu0 %v768
      %v806 = vpop.xlane.xlu0 %805
      %807 = vadd.xlane.f32.xlu0 %v769
      %v808 = vpop.xlane.xlu0 %807
      %809 = vadd.xlane.f32.xlu0 %v770
      %v810 = vpop.xlane.xlu0 %809
      %811 = vadd.xlane.f32.xlu0 %v771
      %v812 = vpop.xlane.xlu0 %811
      %813 = vadd.xlane.f32.xlu0 %v772
      %v814 = vpop.xlane.xlu0 %813
      %815 = vadd.xlane.f32.xlu0 %v773
      %v816 = vpop.xlane.xlu0 %815
      %817 = vadd.xlane.f32.xlu0 %v774
      %v818 = vpop.xlane.xlu0 %817
      %819 = vadd.xlane.f32.xlu0 %v775
      %v820 = vpop.xlane.xlu0 %819
      %821 = vadd.xlane.f32.xlu0 %v776
      %v822 = vpop.xlane.xlu0 %821
      %823 = vadd.xlane.f32.xlu0 %v777
      %v824 = vpop.xlane.xlu0 %823
      %825 = vadd.xlane.f32.xlu0 %v778
      %v826 = vpop.xlane.xlu0 %825
      %827 = vadd.xlane.f32.xlu0 %v779
      %v828 = vpop.xlane.xlu0 %827
      %829 = vadd.xlane.f32.xlu0 %v780
      %v830 = vpop.xlane.xlu0 %829
      %831 = vadd.xlane.f32.xlu0 %v781
      %v832 = vpop.xlane.xlu0 %831
      %833 = vadd.xlane.f32.xlu0 %v782
      %v834 = vpop.xlane.xlu0 %833
      %835 = vadd.xlane.f32.xlu0 %v783
      %v836 = vpop.xlane.xlu0 %835
      %837 = vadd.xlane.f32.xlu0 %v784
      %v838 = vpop.xlane.xlu0 %837
      %839 = vadd.xlane.f32.xlu0 %v785
      %v840 = vpop.xlane.xlu0 %839
      %841 = vadd.xlane.f32.xlu0 %v786
      %v842 = vpop.xlane.xlu0 %841
      %843 = vadd.xlane.f32.xlu0 %v787
      %v844 = vpop.xlane.xlu0 %843
      %845 = vadd.xlane.f32.xlu0 %v788
      %v846 = vpop.xlane.xlu0 %845
      %847 = vadd.xlane.f32.xlu0 %v789
      %v848 = vpop.xlane.xlu0 %847
      %849 = vadd.xlane.f32.xlu0 %v790
      %v850 = vpop.xlane.xlu0 %849
      %851 = vadd.xlane.f32.xlu0 %v791
      %v852 = vpop.xlane.xlu0 %851
      %853 = vadd.xlane.f32.xlu0 %v792
      %v854 = vpop.xlane.xlu0 %853
      %855 = vadd.xlane.f32.xlu0 %v793
      %v856 = vpop.xlane.xlu0 %855
      %857 = vadd.xlane.f32.xlu0 %v794
      %v858 = vpop.xlane.xlu0 %857
      %v859 = vmul.f32 %v796, %v698
      %v860 = vmul.f32 %v798, %v698
      %v861 = vmul.f32 %v800, %v698
      %v862 = vmul.f32 %v802, %v698
      %v863 = vmul.f32 %v804, %v698
      %v864 = vmul.f32 %v806, %v698
      %v865 = vmul.f32 %v808, %v698
      %v866 = vmul.f32 %v810, %v698
      %v867 = vmul.f32 %v812, %v698
      %v868 = vmul.f32 %v814, %v698
      %v869 = vmul.f32 %v816, %v698
      %v870 = vmul.f32 %v818, %v698
      %v871 = vmul.f32 %v820, %v698
      %v872 = vmul.f32 %v822, %v698
      %v873 = vmul.f32 %v824, %v698
      %v874 = vmul.f32 %v826, %v698
      %v875 = vmul.f32 %v828, %v698
      %v876 = vmul.f32 %v830, %v698
      %v877 = vmul.f32 %v832, %v698
      %v878 = vmul.f32 %v834, %v698
      %v879 = vmul.f32 %v836, %v698
      %v880 = vmul.f32 %v838, %v698
      %v881 = vmul.f32 %v840, %v698
      %v882 = vmul.f32 %v842, %v698
      %v883 = vmul.f32 %v844, %v698
      %v884 = vmul.f32 %v846, %v698
      %v885 = vmul.f32 %v848, %v698
      %v886 = vmul.f32 %v850, %v698
      %v887 = vmul.f32 %v852, %v698
      %v888 = vmul.f32 %v854, %v698
      %v889 = vmul.f32 %v856, %v698
      %v890 = vmul.f32 %v858, %v698
      %v891 = vadd.f32 %v859, 1e-05
      %v892 = vadd.f32 %v860, 1e-05
      %v893 = vadd.f32 %v861, 1e-05
      %v894 = vadd.f32 %v862, 1e-05
      %v895 = vadd.f32 %v863, 1e-05
      %v896 = vadd.f32 %v864, 1e-05
      %v897 = vadd.f32 %v865, 1e-05
      %v898 = vadd.f32 %v866, 1e-05
      %v899 = vadd.f32 %v867, 1e-05
      %v900 = vadd.f32 %v868, 1e-05
      %v901 = vadd.f32 %v869, 1e-05
      %v902 = vadd.f32 %v870, 1e-05
      %v903 = vadd.f32 %v871, 1e-05
      %v904 = vadd.f32 %v872, 1e-05
      %v905 = vadd.f32 %v873, 1e-05
      %v906 = vadd.f32 %v874, 1e-05
      %v907 = vadd.f32 %v875, 1e-05
      %v908 = vadd.f32 %v876, 1e-05
      %v909 = vadd.f32 %v877, 1e-05
      %v910 = vadd.f32 %v878, 1e-05
      %v911 = vadd.f32 %v879, 1e-05
      %v912 = vadd.f32 %v880, 1e-05
      %v913 = vadd.f32 %v881, 1e-05
      %v914 = vadd.f32 %v882, 1e-05
      %v915 = vadd.f32 %v883, 1e-05
      %v916 = vadd.f32 %v884, 1e-05
      %v917 = vadd.f32 %v885, 1e-05
      %v918 = vadd.f32 %v886, 1e-05
      %v919 = vadd.f32 %v887, 1e-05
      %v920 = vadd.f32 %v888, 1e-05
      %v921 = vadd.f32 %v889, 1e-05
      %v922 = vadd.f32 %v890, 1e-05
      %v923 = vrsqrt.pop %v891
      %v924 = vmul.f32 %v923, %v891
      %v925 = vmul.f32 %v924, %v923
      %v926 = vmul.f32 0.5, %v925
      %v927 = vsub.f32 1.5, %v926
      %v928 = vmul.f32 %v923, %v927
      %vm929 = vweird.f32 %v891
      %vm930 = vweird.f32 %v923
      %vm931 = vmor %vm929, %vm930
      %v932 = vsel %vm931, %v923, %v928
      %v933 = vrsqrt.pop %v892
      %v934 = vmul.f32 %v933, %v892
      %v935 = vmul.f32 %v934, %v933
      %v936 = vmul.f32 0.5, %v935
      %v937 = vsub.f32 1.5, %v936
      %v938 = vmul.f32 %v933, %v937
      %vm939 = vweird.f32 %v892
      %vm940 = vweird.f32 %v933
      %vm941 = vmor %vm939, %vm940
      %v942 = vsel %vm941, %v933, %v938
      %v943 = vrsqrt.pop %v893
      %v944 = vmul.f32 %v943, %v893
      %v945 = vmul.f32 %v944, %v943
      %v946 = vmul.f32 0.5, %v945
      %v947 = vsub.f32 1.5, %v946
      %v948 = vmul.f32 %v943, %v947
      %vm949 = vweird.f32 %v893
      %vm950 = vweird.f32 %v943
      %vm951 = vmor %vm949, %vm950
      %v952 = vsel %vm951, %v943, %v948
      %v953 = vrsqrt.pop %v894
      %v954 = vmul.f32 %v953, %v894
      %v955 = vmul.f32 %v954, %v953
      %v956 = vmul.f32 0.5, %v955
      %v957 = vsub.f32 1.5, %v956
      %v958 = vmul.f32 %v953, %v957
      %vm959 = vweird.f32 %v894
      %vm960 = vweird.f32 %v953
      %vm961 = vmor %vm959, %vm960
      %v962 = vsel %vm961, %v953, %v958
      %v963 = vrsqrt.pop %v895
      %v964 = vmul.f32 %v963, %v895
      %v965 = vmul.f32 %v964, %v963
      %v966 = vmul.f32 0.5, %v965
      %v967 = vsub.f32 1.5, %v966
      %v968 = vmul.f32 %v963, %v967
      %vm969 = vweird.f32 %v895
      %vm970 = vweird.f32 %v963
      %vm971 = vmor %vm969, %vm970
      %v972 = vsel %vm971, %v963, %v968
      %v973 = vrsqrt.pop %v896
      %v974 = vmul.f32 %v973, %v896
      %v975 = vmul.f32 %v974, %v973
      %v976 = vmul.f32 0.5, %v975
      %v977 = vsub.f32 1.5, %v976
      %v978 = vmul.f32 %v973, %v977
      %vm979 = vweird.f32 %v896
      %vm980 = vweird.f32 %v973
      %vm981 = vmor %vm979, %vm980
      %v982 = vsel %vm981, %v973, %v978
      %v983 = vrsqrt.pop %v897
      %v984 = vmul.f32 %v983, %v897
      %v985 = vmul.f32 %v984, %v983
      %v986 = vmul.f32 0.5, %v985
      %v987 = vsub.f32 1.5, %v986
      %v988 = vmul.f32 %v983, %v987
      %vm989 = vweird.f32 %v897
      %vm990 = vweird.f32 %v983
      %vm991 = vmor %vm989, %vm990
      %v992 = vsel %vm991, %v983, %v988
      %v993 = vrsqrt.pop %v898
      %v994 = vmul.f32 %v993, %v898
      %v995 = vmul.f32 %v994, %v993
      %v996 = vmul.f32 0.5, %v995
      %v997 = vsub.f32 1.5, %v996
      %v998 = vmul.f32 %v993, %v997
      %vm999 = vweird.f32 %v898
      %vm1000 = vweird.f32 %v993
      %vm1001 = vmor %vm999, %vm1000
      %v1002 = vsel %vm1001, %v993, %v998
      %v1003 = vrsqrt.pop %v899
      %v1004 = vmul.f32 %v1003, %v899
      %v1005 = vmul.f32 %v1004, %v1003
      %v1006 = vmul.f32 0.5, %v1005
      %v1007 = vsub.f32 1.5, %v1006
      %v1008 = vmul.f32 %v1003, %v1007
      %vm1009 = vweird.f32 %v899
      %vm1010 = vweird.f32 %v1003
      %vm1011 = vmor %vm1009, %vm1010
      %v1012 = vsel %vm1011, %v1003, %v1008
      %v1013 = vrsqrt.pop %v900
      %v1014 = vmul.f32 %v1013, %v900
      %v1015 = vmul.f32 %v1014, %v1013
      %v1016 = vmul.f32 0.5, %v1015
      %v1017 = vsub.f32 1.5, %v1016
      %v1018 = vmul.f32 %v1013, %v1017
      %vm1019 = vweird.f32 %v900
      %vm1020 = vweird.f32 %v1013
      %vm1021 = vmor %vm1019, %vm1020
      %v1022 = vsel %vm1021, %v1013, %v1018
      %v1023 = vrsqrt.pop %v901
      %v1024 = vmul.f32 %v1023, %v901
      %v1025 = vmul.f32 %v1024, %v1023
      %v1026 = vmul.f32 0.5, %v1025
      %v1027 = vsub.f32 1.5, %v1026
      %v1028 = vmul.f32 %v1023, %v1027
      %vm1029 = vweird.f32 %v901
      %vm1030 = vweird.f32 %v1023
      %vm1031 = vmor %vm1029, %vm1030
      %v1032 = vsel %vm1031, %v1023, %v1028
      %v1033 = vrsqrt.pop %v902
      %v1034 = vmul.f32 %v1033, %v902
      %v1035 = vmul.f32 %v1034, %v1033
      %v1036 = vmul.f32 0.5, %v1035
      %v1037 = vsub.f32 1.5, %v1036
      %v1038 = vmul.f32 %v1033, %v1037
      %vm1039 = vweird.f32 %v902
      %vm1040 = vweird.f32 %v1033
      %vm1041 = vmor %vm1039, %vm1040
      %v1042 = vsel %vm1041, %v1033, %v1038
      %v1043 = vrsqrt.pop %v903
      %v1044 = vmul.f32 %v1043, %v903
      %v1045 = vmul.f32 %v1044, %v1043
      %v1046 = vmul.f32 0.5, %v1045
      %v1047 = vsub.f32 1.5, %v1046
      %v1048 = vmul.f32 %v1043, %v1047
      %vm1049 = vweird.f32 %v903
      %vm1050 = vweird.f32 %v1043
      %vm1051 = vmor %vm1049, %vm1050
      %v1052 = vsel %vm1051, %v1043, %v1048
      %v1053 = vrsqrt.pop %v904
      %v1054 = vmul.f32 %v1053, %v904
      %v1055 = vmul.f32 %v1054, %v1053
      %v1056 = vmul.f32 0.5, %v1055
      %v1057 = vsub.f32 1.5, %v1056
      %v1058 = vmul.f32 %v1053, %v1057
      %vm1059 = vweird.f32 %v904
      %vm1060 = vweird.f32 %v1053
      %vm1061 = vmor %vm1059, %vm1060
      %v1062 = vsel %vm1061, %v1053, %v1058
      %v1063 = vrsqrt.pop %v905
      %v1064 = vmul.f32 %v1063, %v905
      %v1065 = vmul.f32 %v1064, %v1063
      %v1066 = vmul.f32 0.5, %v1065
      %v1067 = vsub.f32 1.5, %v1066
      %v1068 = vmul.f32 %v1063, %v1067
      %vm1069 = vweird.f32 %v905
      %vm1070 = vweird.f32 %v1063
      %vm1071 = vmor %vm1069, %vm1070
      %v1072 = vsel %vm1071, %v1063, %v1068
      %v1073 = vrsqrt.pop %v906
      %v1074 = vmul.f32 %v1073, %v906
      %v1075 = vmul.f32 %v1074, %v1073
      %v1076 = vmul.f32 0.5, %v1075
      %v1077 = vsub.f32 1.5, %v1076
      %v1078 = vmul.f32 %v1073, %v1077
      %vm1079 = vweird.f32 %v906
      %vm1080 = vweird.f32 %v1073
      %vm1081 = vmor %vm1079, %vm1080
      %v1082 = vsel %vm1081, %v1073, %v1078
      %v1083 = vrsqrt.pop %v907
      %v1084 = vmul.f32 %v1083, %v907
      %v1085 = vmul.f32 %v1084, %v1083
      %v1086 = vmul.f32 0.5, %v1085
      %v1087 = vsub.f32 1.5, %v1086
      %v1088 = vmul.f32 %v1083, %v1087
      %vm1089 = vweird.f32 %v907
      %vm1090 = vweird.f32 %v1083
      %vm1091 = vmor %vm1089, %vm1090
      %v1092 = vsel %vm1091, %v1083, %v1088
      %v1093 = vrsqrt.pop %v908
      %v1094 = vmul.f32 %v1093, %v908
      %v1095 = vmul.f32 %v1094, %v1093
      %v1096 = vmul.f32 0.5, %v1095
      %v1097 = vsub.f32 1.5, %v1096
      %v1098 = vmul.f32 %v1093, %v1097
      %vm1099 = vweird.f32 %v908
      %vm1100 = vweird.f32 %v1093
      %vm1101 = vmor %vm1099, %vm1100
      %v1102 = vsel %vm1101, %v1093, %v1098
      %v1103 = vrsqrt.pop %v909
      %v1104 = vmul.f32 %v1103, %v909
      %v1105 = vmul.f32 %v1104, %v1103
      %v1106 = vmul.f32 0.5, %v1105
      %v1107 = vsub.f32 1.5, %v1106
      %v1108 = vmul.f32 %v1103, %v1107
      %vm1109 = vweird.f32 %v909
      %vm1110 = vweird.f32 %v1103
      %vm1111 = vmor %vm1109, %vm1110
      %v1112 = vsel %vm1111, %v1103, %v1108
      %v1113 = vrsqrt.pop %v910
      %v1114 = vmul.f32 %v1113, %v910
      %v1115 = vmul.f32 %v1114, %v1113
      %v1116 = vmul.f32 0.5, %v1115
      %v1117 = vsub.f32 1.5, %v1116
      %v1118 = vmul.f32 %v1113, %v1117
      %vm1119 = vweird.f32 %v910
      %vm1120 = vweird.f32 %v1113
      %vm1121 = vmor %vm1119, %vm1120
      %v1122 = vsel %vm1121, %v1113, %v1118
      %v1123 = vrsqrt.pop %v911
      %v1124 = vmul.f32 %v1123, %v911
      %v1125 = vmul.f32 %v1124, %v1123
      %v1126 = vmul.f32 0.5, %v1125
      %v1127 = vsub.f32 1.5, %v1126
      %v1128 = vmul.f32 %v1123, %v1127
      %vm1129 = vweird.f32 %v911
      %vm1130 = vweird.f32 %v1123
      %vm1131 = vmor %vm1129, %vm1130
      %v1132 = vsel %vm1131, %v1123, %v1128
      %v1133 = vrsqrt.pop %v912
      %v1134 = vmul.f32 %v1133, %v912
      %v1135 = vmul.f32 %v1134, %v1133
      %v1136 = vmul.f32 0.5, %v1135
      %v1137 = vsub.f32 1.5, %v1136
      %v1138 = vmul.f32 %v1133, %v1137
      %vm1139 = vweird.f32 %v912
      %vm1140 = vweird.f32 %v1133
      %vm1141 = vmor %vm1139, %vm1140
      %v1142 = vsel %vm1141, %v1133, %v1138
      %v1143 = vrsqrt.pop %v913
      %v1144 = vmul.f32 %v1143, %v913
      %v1145 = vmul.f32 %v1144, %v1143
      %v1146 = vmul.f32 0.5, %v1145
      %v1147 = vsub.f32 1.5, %v1146
      %v1148 = vmul.f32 %v1143, %v1147
      %vm1149 = vweird.f32 %v913
      %vm1150 = vweird.f32 %v1143
      %vm1151 = vmor %vm1149, %vm1150
      %v1152 = vsel %vm1151, %v1143, %v1148
      %v1153 = vrsqrt.pop %v914
      %v1154 = vmul.f32 %v1153, %v914
      %v1155 = vmul.f32 %v1154, %v1153
      %v1156 = vmul.f32 0.5, %v1155
      %v1157 = vsub.f32 1.5, %v1156
      %v1158 = vmul.f32 %v1153, %v1157
      %vm1159 = vweird.f32 %v914
      %vm1160 = vweird.f32 %v1153
      %vm1161 = vmor %vm1159, %vm1160
      %v1162 = vsel %vm1161, %v1153, %v1158
      %v1163 = vrsqrt.pop %v915
      %v1164 = vmul.f32 %v1163, %v915
      %v1165 = vmul.f32 %v1164, %v1163
      %v1166 = vmul.f32 0.5, %v1165
      %v1167 = vsub.f32 1.5, %v1166
      %v1168 = vmul.f32 %v1163, %v1167
      %vm1169 = vweird.f32 %v915
      %vm1170 = vweird.f32 %v1163
      %vm1171 = vmor %vm1169, %vm1170
      %v1172 = vsel %vm1171, %v1163, %v1168
      %v1173 = vrsqrt.pop %v916
      %v1174 = vmul.f32 %v1173, %v916
      %v1175 = vmul.f32 %v1174, %v1173
      %v1176 = vmul.f32 0.5, %v1175
      %v1177 = vsub.f32 1.5, %v1176
      %v1178 = vmul.f32 %v1173, %v1177
      %vm1179 = vweird.f32 %v916
      %vm1180 = vweird.f32 %v1173
      %vm1181 = vmor %vm1179, %vm1180
      %v1182 = vsel %vm1181, %v1173, %v1178
      %v1183 = vrsqrt.pop %v917
      %v1184 = vmul.f32 %v1183, %v917
      %v1185 = vmul.f32 %v1184, %v1183
      %v1186 = vmul.f32 0.5, %v1185
      %v1187 = vsub.f32 1.5, %v1186
      %v1188 = vmul.f32 %v1183, %v1187
      %vm1189 = vweird.f32 %v917
      %vm1190 = vweird.f32 %v1183
      %vm1191 = vmor %vm1189, %vm1190
      %v1192 = vsel %vm1191, %v1183, %v1188
      %v1193 = vrsqrt.pop %v918
      %v1194 = vmul.f32 %v1193, %v918
      %v1195 = vmul.f32 %v1194, %v1193
      %v1196 = vmul.f32 0.5, %v1195
      %v1197 = vsub.f32 1.5, %v1196
      %v1198 = vmul.f32 %v1193, %v1197
      %vm1199 = vweird.f32 %v918
      %vm1200 = vweird.f32 %v1193
      %vm1201 = vmor %vm1199, %vm1200
      %v1202 = vsel %vm1201, %v1193, %v1198
      %v1203 = vrsqrt.pop %v919
      %v1204 = vmul.f32 %v1203, %v919
      %v1205 = vmul.f32 %v1204, %v1203
      %v1206 = vmul.f32 0.5, %v1205
      %v1207 = vsub.f32 1.5, %v1206
      %v1208 = vmul.f32 %v1203, %v1207
      %vm1209 = vweird.f32 %v919
      %vm1210 = vweird.f32 %v1203
      %vm1211 = vmor %vm1209, %vm1210
      %v1212 = vsel %vm1211, %v1203, %v1208
      %v1213 = vrsqrt.pop %v920
      %v1214 = vmul.f32 %v1213, %v920
      %v1215 = vmul.f32 %v1214, %v1213
      %v1216 = vmul.f32 0.5, %v1215
      %v1217 = vsub.f32 1.5, %v1216
      %v1218 = vmul.f32 %v1213, %v1217
      %vm1219 = vweird.f32 %v920
      %vm1220 = vweird.f32 %v1213
      %vm1221 = vmor %vm1219, %vm1220
      %v1222 = vsel %vm1221, %v1213, %v1218
      %v1223 = vrsqrt.pop %v921
      %v1224 = vmul.f32 %v1223, %v921
      %v1225 = vmul.f32 %v1224, %v1223
      %v1226 = vmul.f32 0.5, %v1225
      %v1227 = vsub.f32 1.5, %v1226
      %v1228 = vmul.f32 %v1223, %v1227
      %vm1229 = vweird.f32 %v921
      %vm1230 = vweird.f32 %v1223
      %vm1231 = vmor %vm1229, %vm1230
      %v1232 = vsel %vm1231, %v1223, %v1228
      %v1233 = vrsqrt.pop %v922
      %v1234 = vmul.f32 %v1233, %v922
      %v1235 = vmul.f32 %v1234, %v1233
      %v1236 = vmul.f32 0.5, %v1235
      %v1237 = vsub.f32 1.5, %v1236
      %v1238 = vmul.f32 %v1233, %v1237
      %vm1239 = vweird.f32 %v922
      %vm1240 = vweird.f32 %v1233
      %vm1241 = vmor %vm1239, %vm1240
      %v1242 = vsel %vm1241, %v1233, %v1238
      %v1243 = vmul.f32 %v731, %v932
      %v1244 = vmul.f32 %v732, %v942
      %v1245 = vmul.f32 %v733, %v952
      %v1246 = vmul.f32 %v734, %v962
      %v1247 = vmul.f32 %v735, %v972
      %v1248 = vmul.f32 %v736, %v982
      %v1249 = vmul.f32 %v737, %v992
      %v1250 = vmul.f32 %v738, %v1002
      %v1251 = vmul.f32 %v739, %v1012
      %v1252 = vmul.f32 %v740, %v1022
      %v1253 = vmul.f32 %v741, %v1032
      %v1254 = vmul.f32 %v742, %v1042
      %v1255 = vmul.f32 %v743, %v1052
      %v1256 = vmul.f32 %v744, %v1062
      %v1257 = vmul.f32 %v745, %v1072
      %v1258 = vmul.f32 %v746, %v1082
      %v1259 = vmul.f32 %v747, %v1092
      %v1260 = vmul.f32 %v748, %v1102
      %v1261 = vmul.f32 %v749, %v1112
      %v1262 = vmul.f32 %v750, %v1122
      %v1263 = vmul.f32 %v751, %v1132
      %v1264 = vmul.f32 %v752, %v1142
      %v1265 = vmul.f32 %v753, %v1152
      %v1266 = vmul.f32 %v754, %v1162
      %v1267 = vmul.f32 %v755, %v1172
      %v1268 = vmul.f32 %v756, %v1182
      %v1269 = vmul.f32 %v757, %v1192
      %v1270 = vmul.f32 %v758, %v1202
      %v1271 = vmul.f32 %v759, %v1212
      %v1272 = vmul.f32 %v760, %v1222
      %v1273 = vmul.f32 %v761, %v1232
      %v1274 = vmul.f32 %v762, %v1242
      %v1275 = vadd.f32 %v1243, %v1244
      %v1276 = vadd.f32 %v1275, %v1245
      %v1277 = vadd.f32 %v1276, %v1246
      %v1278 = vadd.f32 %v1277, %v1247
      %v1279 = vadd.f32 %v1278, %v1248
      %v1280 = vadd.f32 %v1279, %v1249
      %v1281 = vadd.f32 %v1280, %v1250
      %v1282 = vadd.f32 %v1281, %v1251
      %v1283 = vadd.f32 %v1282, %v1252
      %v1284 = vadd.f32 %v1283, %v1253
      %v1285 = vadd.f32 %v1284, %v1254
      %v1286 = vadd.f32 %v1285, %v1255
      %v1287 = vadd.f32 %v1286, %v1256
      %v1288 = vadd.f32 %v1287, %v1257
      %v1289 = vadd.f32 %v1288, %v1258
      %v1290 = vadd.f32 %v1289, %v1259
      %v1291 = vadd.f32 %v1290, %v1260
      %v1292 = vadd.f32 %v1291, %v1261
      %v1293 = vadd.f32 %v1292, %v1262
      %v1294 = vadd.f32 %v1293, %v1263
      %v1295 = vadd.f32 %v1294, %v1264
      %v1296 = vadd.f32 %v1295, %v1265
      %v1297 = vadd.f32 %v1296, %v1266
      %v1298 = vadd.f32 %v1297, %v1267
      %v1299 = vadd.f32 %v1298, %v1268
      %v1300 = vadd.f32 %v1299, %v1269
      %v1301 = vadd.f32 %v1300, %v1270
      %v1302 = vadd.f32 %v1301, %v1271
      %v1303 = vadd.f32 %v1302, %v1272
      %v1304 = vadd.f32 %v1303, %v1273
      %v1305 = vadd.f32 %v1304, %v1274
      %v1306 = vrot.slane %v1305, 4
      %v1307 = vadd.f32 %v1305, %v1306
      %v1308 = vrot.slane %v1307, 2
      %v1309 = vadd.f32 %v1307, %v1308
      %v1310 = vrot.slane %v1309, 1
      %v1311 = vadd.f32 %v1309, %v1310
      %v1312 = vmul.f32 %v1311, 0.00390625
      %v1313 = vld [vmem:[%s343] sm:$0xff]
      %v1314 = vadd.f32 %v1313, %v1312
      %1315 = vst [vmem:[%s343] sm:$0xff] %v1314
      // Predicated region
      $region45: #{speed_estimator_forward.2} parent=39 // pred_check
        %p1316 = pneg %p345
      $region46: #{speed_estimator_forward.2} parent=39 // pred_check_branch
        %1318 = sbr.rel (%p1316) target = $region48
      $region47: #{speed_estimator_forward.2} parent=39 // pred_region
        %v1319 = vld [vmem:[%s343] sm:$0xff]
        %v1320 = vld [vmem:[%s332] sm:$0x1]
        %v1322 = vperm.slane %v1320, 0
        %v1324 = vmul.f32 %v1319, %v1322
        %v1325 = vld [vmem:[%s335] sm:$0x1]
        %v1327 = vperm.slane %v1325, 0
        %v1329 = vadd.f32 %v1324, %v1327
        %1330 = vst [vmem:[%s343] sm:$0xff] %v1329
      $region48: #{speed_estimator_forward.2} parent=39 // pred_fallthru
        _
      %p1331 = scmp.lt.s32.totalorder %s21, 1
      %s1332 = scalar_select %p1331, %s21, 1
      %p1333 = scmp.lt.s32.totalorder %s22, 1
      %s1334 = scalar_select %p1333, %s22, 1
      %s1335 = smul.addr %s1332, 2
      %s1336 = sadd.s32 %s1334, %s1335
      %s1337 = smul.addr %s1336, 8
      %s1338 = scalar_lea.vmem %s5, %s1337
      // Predicated region
      $region49: #{speed_estimator_forward.2} parent=39 // pred_check
        %p1339 = pneg %p189
      $region50: #{speed_estimator_forward.2} parent=39 // pred_check_branch
        %1341 = sbr.rel (%p1339) target = $region52
      $region51: #{speed_estimator_forward.2} parent=39 // pred_region
        _
      $region52: #{speed_estimator_forward.2} parent=39 // pred_fallthru
        _
    $region40: #{speed_estimator_forward.2} parent=5 // pred_fallthru
      _
    %p1342 = scmp.le.s32.totalorder 2, %s11
    // Predicated region
    $region53: #{speed_estimator_forward.2} parent=5 // pred_check
      %p1343 = pneg %p1342
    $region54: #{speed_estimator_forward.2} parent=5 // pred_check_branch
      %1345 = sbr.rel (%p1343) target = $region56
    $region55: #{speed_estimator_forward.2} parent=5 // pred_region
      %s1346 = ssub.s32 %s11, 2
      // Predicated region
      $region57: #{speed_estimator_forward.2} parent=55 // pred_check
        %p1347 = pneg %p195
      $region58: #{speed_estimator_forward.2} parent=55 // pred_check_branch
        %1349 = sbr.rel (%p1347) target = $region60
      $region59: #{speed_estimator_forward.2} parent=55 // pred_region
        %p1350 = scmp.lt.s32.totalorder %s24, 1
        %s1351 = scalar_select %p1350, %s24, 1
        %p1352 = scmp.lt.s32.totalorder %s25, 1
        %s1353 = scalar_select %p1352, %s25, 1
        %s1354 = smul.addr %s1351, 2
        %s1355 = sadd.s32 %s1353, %s1354
        %s1356 = smul.addr %s1355, 8
        %s1357 = scalar_lea.vmem %s5, %s1356
      $region60: #{speed_estimator_forward.2} parent=55 // pred_fallthru
        _
    $region56: #{speed_estimator_forward.2} parent=5 // pred_fallthru
      _
  $region6: #{speed_estimator_forward.2} parent=0 // loop_footer
    %s15 = sadd.s32 1, %s11
  $region7: #{speed_estimator_forward.2} parent=0 // loop_footer_branch
    %10 = sbr.rel target = $region3
  $region8: #{speed_estimator_forward.2} parent=0 // loop_exit
    _

// kernel: speed_estimator_forward.3
$region0: #{speed_estimator_forward.3}
  #allocation0 [shape = 'u32[]', space=smem, size = 0x4, offset = 0x4, fixed_abs, tag = 'smem constant byte address 0x4 - core index']
  #allocation1 [shape = 'u32[72,128]{1,0:T(1,128)}', space=vmem, size = 0x9000, scoped, tag = 'internal scratch']
  %s0 = inlined_call_operand.vmem [shape: bf16[8,256], index: 0, kind: input, shape index: {}]
  %s1 = inlined_call_operand.vmem [shape: bf16[256,512], index: 1, kind: input, shape index: {}]
  %s2 = inlined_call_operand.vmem [shape: f32[1,512], index: 2, kind: input, shape index: {}]
  %s3 = inlined_call_operand.vmem [shape: bf16[512,128], index: 3, kind: input, shape index: {}]
  %s4 = inlined_call_operand.vmem [shape: f32[1,128], index: 4, kind: input, shape index: {}]
  %s5 = inlined_call_operand.vmem [shape: bf16[128,128], index: 5, kind: input, shape index: {}]
  %s6 = inlined_call_operand.vmem [shape: f32[1,128], index: 6, kind: input, shape index: {}]
  %s7 = inlined_call_operand.vmem [shape: f32[8,128], index: 7, kind: output, shape index: {}]
  %s8 = sld [smem:[#allocation0]]
  $region38: #{speed_estimator_forward.3} parent=0
    _
  %s10 = ssub.s32 1, %s8
  %s11 = scalar_select 0, %s10, %s8
  // Predicated region
  $region2: #{speed_estimator_forward.3} parent=0 // pred_check
    _
  $region3: #{speed_estimator_forward.3} parent=0 // pred_check_branch
    %13 = sbr.rel (0) target = $region5
  $region4: #{speed_estimator_forward.3} parent=0 // pred_region
    _
  $region5: #{speed_estimator_forward.3} parent=0 // pred_fallthru
    _
  // Predicated region
  $region6: #{speed_estimator_forward.3} parent=0 // pred_check
    _
  $region7: #{speed_estimator_forward.3} parent=0 // pred_check_branch
    %15 = sbr.rel (0) target = $region9
  $region8: #{speed_estimator_forward.3} parent=0 // pred_region
    _
  $region9: #{speed_estimator_forward.3} parent=0 // pred_fallthru
    _
  // Predicated region
  $region10: #{speed_estimator_forward.3} parent=0 // pred_check
    _
  $region11: #{speed_estimator_forward.3} parent=0 // pred_check_branch
    %17 = sbr.rel (0) target = $region13
  $region12: #{speed_estimator_forward.3} parent=0 // pred_region
    _
  $region13: #{speed_estimator_forward.3} parent=0 // pred_fallthru
    _
  // Predicated region
  $region14: #{speed_estimator_forward.3} parent=0 // pred_check
    _
  $region15: #{speed_estimator_forward.3} parent=0 // pred_check_branch
    %19 = sbr.rel (0) target = $region17
  $region16: #{speed_estimator_forward.3} parent=0 // pred_region
    _
  $region17: #{speed_estimator_forward.3} parent=0 // pred_fallthru
    _
  // Predicated region
  $region18: #{speed_estimator_forward.3} parent=0 // pred_check
    _
  $region19: #{speed_estimator_forward.3} parent=0 // pred_check_branch
    %21 = sbr.rel (0) target = $region21
  $region20: #{speed_estimator_forward.3} parent=0 // pred_region
    _
  $region21: #{speed_estimator_forward.3} parent=0 // pred_fallthru
    _
  // Predicated region
  $region22: #{speed_estimator_forward.3} parent=0 // pred_check
    _
  $region23: #{speed_estimator_forward.3} parent=0 // pred_check_branch
    %23 = sbr.rel (0) target = $region25
  $region24: #{speed_estimator_forward.3} parent=0 // pred_region
    _
  $region25: #{speed_estimator_forward.3} parent=0 // pred_fallthru
    _
  // Predicated region
  $region26: #{speed_estimator_forward.3} parent=0 // pred_check
    _
  $region27: #{speed_estimator_forward.3} parent=0 // pred_check_branch
    %25 = sbr.rel (0) target = $region29
  $region28: #{speed_estimator_forward.3} parent=0 // pred_region
    _
  $region29: #{speed_estimator_forward.3} parent=0 // pred_fallthru
    _
  %v26 = vld [vmem:[%s0] sm:$0xff]
  %v27 = vld [vmem:[%s1] sm:$0xff]
  %v28 = vld [vmem:[%s1 + $0x8] sm:$0xff]
  %v29 = vld [vmem:[%s1 + $0x10] sm:$0xff]
  %v30 = vld [vmem:[%s1 + $0x18] sm:$0xff]
  %v31 = vld [vmem:[%s1 + $0x20] sm:$0xff]
  %v32 = vld [vmem:[%s1 + $0x28] sm:$0xff]
  %v33 = vld [vmem:[%s1 + $0x30] sm:$0xff]
  %v34 = vld [vmem:[%s1 + $0x38] sm:$0xff]
  %v35 = vld [vmem:[%s1 + $0x40] sm:$0xff]
  %v36 = vld [vmem:[%s1 + $0x48] sm:$0xff]
  %v37 = vld [vmem:[%s1 + $0x50] sm:$0xff]
  %v38 = vld [vmem:[%s1 + $0x58] sm:$0xff]
  %v39 = vld [vmem:[%s1 + $0x60] sm:$0xff]
  %v40 = vld [vmem:[%s1 + $0x68] sm:$0xff]
  %v41 = vld [vmem:[%s1 + $0x70] sm:$0xff]
  %v42 = vld [vmem:[%s1 + $0x78] sm:$0xff]
  %v43 = vld [vmem:[%s1 + $0x80] sm:$0xff]
  %v44 = vld [vmem:[%s1 + $0x88] sm:$0xff]
  %v45 = vld [vmem:[%s1 + $0x90] sm:$0xff]
  %v46 = vld [vmem:[%s1 + $0x98] sm:$0xff]
  %v47 = vld [vmem:[%s1 + $0xa0] sm:$0xff]
  %v48 = vld [vmem:[%s1 + $0xa8] sm:$0xff]
  %v49 = vld [vmem:[%s1 + $0xb0] sm:$0xff]
  %v50 = vld [vmem:[%s1 + $0xb8] sm:$0xff]
  %v51 = vld [vmem:[%s1 + $0xc0] sm:$0xff]
  %v52 = vld [vmem:[%s1 + $0xc8] sm:$0xff]
  %v53 = vld [vmem:[%s1 + $0xd0] sm:$0xff]
  %v54 = vld [vmem:[%s1 + $0xd8] sm:$0xff]
  %v55 = vld [vmem:[%s1 + $0xe0] sm:$0xff]
  %v56 = vld [vmem:[%s1 + $0xe8] sm:$0xff]
  %v57 = vld [vmem:[%s1 + $0xf0] sm:$0xff]
  %v58 = vld [vmem:[%s1 + $0xf8] sm:$0xff]
  %v59 = vld [vmem:[%s1 + $0x100] sm:$0xff]
  %v60 = vld [vmem:[%s1 + $0x108] sm:$0xff]
  %v61 = vld [vmem:[%s1 + $0x110] sm:$0xff]
  %v62 = vld [vmem:[%s1 + $0x118] sm:$0xff]
  %v63 = vld [vmem:[%s1 + $0x120] sm:$0xff]
  %v64 = vld [vmem:[%s1 + $0x128] sm:$0xff]
  %v65 = vld [vmem:[%s1 + $0x130] sm:$0xff]
  %v66 = vld [vmem:[%s1 + $0x138] sm:$0xff]
  %v67 = vld [vmem:[%s1 + $0x140] sm:$0xff]
  %v68 = vld [vmem:[%s1 + $0x148] sm:$0xff]
  %v69 = vld [vmem:[%s1 + $0x150] sm:$0xff]
  %v70 = vld [vmem:[%s1 + $0x158] sm:$0xff]
  %v71 = vld [vmem:[%s1 + $0x160] sm:$0xff]
  %v72 = vld [vmem:[%s1 + $0x168] sm:$0xff]
  %v73 = vld [vmem:[%s1 + $0x170] sm:$0xff]
  %v74 = vld [vmem:[%s1 + $0x178] sm:$0xff]
  %v75 = vld [vmem:[%s1 + $0x180] sm:$0xff]
  %v76 = vld [vmem:[%s1 + $0x188] sm:$0xff]
  %v77 = vld [vmem:[%s1 + $0x190] sm:$0xff]
  %v78 = vld [vmem:[%s1 + $0x198] sm:$0xff]
  %v79 = vld [vmem:[%s1 + $0x1a0] sm:$0xff]
  %v80 = vld [vmem:[%s1 + $0x1a8] sm:$0xff]
  %v81 = vld [vmem:[%s1 + $0x1b0] sm:$0xff]
  %v82 = vld [vmem:[%s1 + $0x1b8] sm:$0xff]
  %v83 = vld [vmem:[%s1 + $0x1c0] sm:$0xff]
  %v84 = vld [vmem:[%s1 + $0x1c8] sm:$0xff]
  %v85 = vld [vmem:[%s1 + $0x1d0] sm:$0xff]
  %v86 = vld [vmem:[%s1 + $0x1d8] sm:$0xff]
  %v87 = vld [vmem:[%s1 + $0x1e0] sm:$0xff]
  %v88 = vld [vmem:[%s1 + $0x1e8] sm:$0xff]
  %v89 = vld [vmem:[%s1 + $0x1f0] sm:$0xff]
  %v90 = vld [vmem:[%s1 + $0x1f8] sm:$0xff]
  %v91 = vld [vmem:[%s2] sm:$0xf]
  %v93 = vperm.slane %v91, 0
  %v94 = vperm.slane %v91, 1
  %v95 = vperm.slane %v91, 2
  %v96 = vperm.slane %v91, 3
  %v102 = vunpack.c.l.b16 %v26
  %v103 = vunpack.c.h.b16 %v26
  %v104 = vpack.c.b16 %v102, %v102
  %v105 = vpack.c.b16 %v103, %v103
  %v172 = vunpack.c.l.b16 %v27
  %v173 = vunpack.c.h.b16 %v27
  %v174 = vunpack.c.l.b16 %v28
  %v175 = vunpack.c.h.b16 %v28
  %v176 = vunpack.c.l.b16 %v29
  %v177 = vunpack.c.h.b16 %v29
  %v178 = vunpack.c.l.b16 %v30
  %v179 = vunpack.c.h.b16 %v30
  %v180 = vunpack.c.l.b16 %v31
  %v181 = vunpack.c.h.b16 %v31
  %v182 = vunpack.c.l.b16 %v32
  %v183 = vunpack.c.h.b16 %v32
  %v184 = vunpack.c.l.b16 %v33
  %v185 = vunpack.c.h.b16 %v33
  %v186 = vunpack.c.l.b16 %v34
  %v187 = vunpack.c.h.b16 %v34
  %v188 = vunpack.c.l.b16 %v35
  %v189 = vunpack.c.h.b16 %v35
  %v190 = vunpack.c.l.b16 %v36
  %v191 = vunpack.c.h.b16 %v36
  %v192 = vunpack.c.l.b16 %v37
  %v193 = vunpack.c.h.b16 %v37
  %v194 = vunpack.c.l.b16 %v38
  %v195 = vunpack.c.h.b16 %v38
  %v196 = vunpack.c.l.b16 %v39
  %v197 = vunpack.c.h.b16 %v39
  %v198 = vunpack.c.l.b16 %v40
  %v199 = vunpack.c.h.b16 %v40
  %v200 = vunpack.c.l.b16 %v41
  %v201 = vunpack.c.h.b16 %v41
  %v202 = vunpack.c.l.b16 %v42
  %v203 = vunpack.c.h.b16 %v42
  %v204 = vunpack.c.l.b16 %v43
  %v205 = vunpack.c.h.b16 %v43
  %v206 = vunpack.c.l.b16 %v44
  %v207 = vunpack.c.h.b16 %v44
  %v208 = vunpack.c.l.b16 %v45
  %v209 = vunpack.c.h.b16 %v45
  %v210 = vunpack.c.l.b16 %v46
  %v211 = vunpack.c.h.b16 %v46
  %v212 = vunpack.c.l.b16 %v47
  %v213 = vunpack.c.h.b16 %v47
  %v214 = vunpack.c.l.b16 %v48
  %v215 = vunpack.c.h.b16 %v48
  %v216 = vunpack.c.l.b16 %v49
  %v217 = vunpack.c.h.b16 %v49
  %v218 = vunpack.c.l.b16 %v50
  %v219 = vunpack.c.h.b16 %v50
  %v220 = vunpack.c.l.b16 %v51
  %v221 = vunpack.c.h.b16 %v51
  %v222 = vunpack.c.l.b16 %v52
  %v223 = vunpack.c.h.b16 %v52
  %v224 = vunpack.c.l.b16 %v53
  %v225 = vunpack.c.h.b16 %v53
  %v226 = vunpack.c.l.b16 %v54
  %v227 = vunpack.c.h.b16 %v54
  %v228 = vunpack.c.l.b16 %v55
  %v229 = vunpack.c.h.b16 %v55
  %v230 = vunpack.c.l.b16 %v56
  %v231 = vunpack.c.h.b16 %v56
  %v232 = vunpack.c.l.b16 %v57
  %v233 = vunpack.c.h.b16 %v57
  %v234 = vunpack.c.l.b16 %v58
  %v235 = vunpack.c.h.b16 %v58
  %v236 = vunpack.c.l.b16 %v59
  %v237 = vunpack.c.h.b16 %v59
  %v238 = vunpack.c.l.b16 %v60
  %v239 = vunpack.c.h.b16 %v60
  %v240 = vunpack.c.l.b16 %v61
  %v241 = vunpack.c.h.b16 %v61
  %v242 = vunpack.c.l.b16 %v62
  %v243 = vunpack.c.h.b16 %v62
  %v244 = vunpack.c.l.b16 %v63
  %v245 = vunpack.c.h.b16 %v63
  %v246 = vunpack.c.l.b16 %v64
  %v247 = vunpack.c.h.b16 %v64
  %v248 = vunpack.c.l.b16 %v65
  %v249 = vunpack.c.h.b16 %v65
  %v250 = vunpack.c.l.b16 %v66
  %v251 = vunpack.c.h.b16 %v66
  %v252 = vunpack.c.l.b16 %v67
  %v253 = vunpack.c.h.b16 %v67
  %v254 = vunpack.c.l.b16 %v68
  %v255 = vunpack.c.h.b16 %v68
  %v256 = vunpack.c.l.b16 %v69
  %v257 = vunpack.c.h.b16 %v69
  %v258 = vunpack.c.l.b16 %v70
  %v259 = vunpack.c.h.b16 %v70
  %v260 = vunpack.c.l.b16 %v71
  %v261 = vunpack.c.h.b16 %v71
  %v262 = vunpack.c.l.b16 %v72
  %v263 = vunpack.c.h.b16 %v72
  %v264 = vunpack.c.l.b16 %v73
  %v265 = vunpack.c.h.b16 %v73
  %v266 = vunpack.c.l.b16 %v74
  %v267 = vunpack.c.h.b16 %v74
  %v268 = vunpack.c.l.b16 %v75
  %v269 = vunpack.c.h.b16 %v75
  %v270 = vunpack.c.l.b16 %v76
  %v271 = vunpack.c.h.b16 %v76
  %v272 = vunpack.c.l.b16 %v77
  %v273 = vunpack.c.h.b16 %v77
  %v274 = vunpack.c.l.b16 %v78
  %v275 = vunpack.c.h.b16 %v78
  %v276 = vunpack.c.l.b16 %v79
  %v277 = vunpack.c.h.b16 %v79
  %v278 = vunpack.c.l.b16 %v80
  %v279 = vunpack.c.h.b16 %v80
  %v280 = vunpack.c.l.b16 %v81
  %v281 = vunpack.c.h.b16 %v81
  %v282 = vunpack.c.l.b16 %v82
  %v283 = vunpack.c.h.b16 %v82
  %v284 = vunpack.c.l.b16 %v83
  %v285 = vunpack.c.h.b16 %v83
  %v286 = vunpack.c.l.b16 %v84
  %v287 = vunpack.c.h.b16 %v84
  %v288 = vunpack.c.l.b16 %v85
  %v289 = vunpack.c.h.b16 %v85
  %v290 = vunpack.c.l.b16 %v86
  %v291 = vunpack.c.h.b16 %v86
  %v292 = vunpack.c.l.b16 %v87
  %v293 = vunpack.c.h.b16 %v87
  %v294 = vunpack.c.l.b16 %v88
  %v295 = vunpack.c.h.b16 %v88
  %v296 = vunpack.c.l.b16 %v89
  %v297 = vunpack.c.h.b16 %v89
  %v298 = vunpack.c.l.b16 %v90
  %v299 = vunpack.c.h.b16 %v90
  %v300 = vpack.c.b16 %v176, %v172
  %v301 = vpack.c.b16 %v177, %v173
  %v302 = vpack.c.b16 %v178, %v174
  %v303 = vpack.c.b16 %v179, %v175
  %v304 = vpack.c.b16 %v184, %v180
  %v305 = vpack.c.b16 %v185, %v181
  %v306 = vpack.c.b16 %v186, %v182
  %v307 = vpack.c.b16 %v187, %v183
  %v308 = vpack.c.b16 %v192, %v188
  %v309 = vpack.c.b16 %v193, %v189
  %v310 = vpack.c.b16 %v194, %v190
  %v311 = vpack.c.b16 %v195, %v191
  %v312 = vpack.c.b16 %v200, %v196
  %v313 = vpack.c.b16 %v201, %v197
  %v314 = vpack.c.b16 %v202, %v198
  %v315 = vpack.c.b16 %v203, %v199
  %v316 = vpack.c.b16 %v208, %v204
  %v317 = vpack.c.b16 %v209, %v205
  %v318 = vpack.c.b16 %v210, %v206
  %v319 = vpack.c.b16 %v211, %v207
  %v320 = vpack.c.b16 %v216, %v212
  %v321 = vpack.c.b16 %v217, %v213
  %v322 = vpack.c.b16 %v218, %v214
  %v323 = vpack.c.b16 %v219, %v215
  %v324 = vpack.c.b16 %v224, %v220
  %v325 = vpack.c.b16 %v225, %v221
  %v326 = vpack.c.b16 %v226, %v222
  %v327 = vpack.c.b16 %v227, %v223
  %v328 = vpack.c.b16 %v232, %v228
  %v329 = vpack.c.b16 %v233, %v229
  %v330 = vpack.c.b16 %v234, %v230
  %v331 = vpack.c.b16 %v235, %v231
  %v332 = vpack.c.b16 %v240, %v236
  %v333 = vpack.c.b16 %v241, %v237
  %v334 = vpack.c.b16 %v242, %v238
  %v335 = vpack.c.b16 %v243, %v239
  %v336 = vpack.c.b16 %v248, %v244
  %v337 = vpack.c.b16 %v249, %v245
  %v338 = vpack.c.b16 %v250, %v246
  %v339 = vpack.c.b16 %v251, %v247
  %v340 = vpack.c.b16 %v256, %v252
  %v341 = vpack.c.b16 %v257, %v253
  %v342 = vpack.c.b16 %v258, %v254
  %v343 = vpack.c.b16 %v259, %v255
  %v344 = vpack.c.b16 %v264, %v260
  %v345 = vpack.c.b16 %v265, %v261
  %v346 = vpack.c.b16 %v266, %v262
  %v347 = vpack.c.b16 %v267, %v263
  %v348 = vpack.c.b16 %v272, %v268
  %v349 = vpack.c.b16 %v273, %v269
  %v350 = vpack.c.b16 %v274, %v270
  %v351 = vpack.c.b16 %v275, %v271
  %v352 = vpack.c.b16 %v280, %v276
  %v353 = vpack.c.b16 %v281, %v277
  %v354 = vpack.c.b16 %v282, %v278
  %v355 = vpack.c.b16 %v283, %v279
  %v356 = vpack.c.b16 %v288, %v284
  %v357 = vpack.c.b16 %v289, %v285
  %v358 = vpack.c.b16 %v290, %v286
  %v359 = vpack.c.b16 %v291, %v287
  %v360 = vpack.c.b16 %v296, %v292
  %v361 = vpack.c.b16 %v297, %v293
  %v362 = vpack.c.b16 %v298, %v294
  %v363 = vpack.c.b16 %v299, %v295
  %428 = vmatpush.bf16.msra.mxu0 %v328
  %429 = vmatpush.bf16.msra.mxu0 %v324
  %430 = vmatpush.bf16.msra.mxu0 %v320
  %431 = vmatpush.bf16.msra.mxu0 %v316
  %432 = vmatpush.bf16.msra.mxu0 %v312
  %433 = vmatpush.bf16.msra.mxu0 %v308
  %434 = vmatpush.bf16.msra.mxu0 %v304
  %435 = vmatpush.bf16.msra.mxu0 %v300
  %436 = vmatmul.bf16.gmra.mxu0 %v104
  %v437 = vpop.f32.mrf.mxu0
  %v438 = vadd.f32 %v93, %v437
  %v439 = vpop.f32.mrf.mxu0
  %440 = vdwg.mxu0
  %441 = vmatpush.bf16.msra.mxu0 %v360
  %442 = vmatpush.bf16.msra.mxu0 %v356
  %443 = vmatpush.bf16.msra.mxu0 %v352
  %444 = vmatpush.bf16.msra.mxu0 %v348
  %445 = vmatpush.bf16.msra.mxu0 %v344
  %446 = vmatpush.bf16.msra.mxu0 %v340
  %447 = vmatpush.bf16.msra.mxu0 %v336
  %448 = vmatpush.bf16.msra.mxu0 %v332
  %449 = vmatmul.bf16.gmra.mxu0 %v105
  %v450 = vpop.f32.mrf.mxu0
  %v451 = vadd.f32 %v438, %v450
  %v452 = vpop.f32.mrf.mxu0
  %453 = vdwg.mxu0
  %454 = vmatpush.bf16.msra.mxu0 %v329
  %455 = vmatpush.bf16.msra.mxu0 %v325
  %456 = vmatpush.bf16.msra.mxu0 %v321
  %457 = vmatpush.bf16.msra.mxu0 %v317
  %458 = vmatpush.bf16.msra.mxu0 %v313
  %459 = vmatpush.bf16.msra.mxu0 %v309
  %460 = vmatpush.bf16.msra.mxu0 %v305
  %461 = vmatpush.bf16.msra.mxu0 %v301
  %462 = vmatmul.bf16.gmra.mxu0 %v104
  %v463 = vpop.f32.mrf.mxu0
  %v464 = vadd.f32 %v94, %v463
  %v465 = vpop.f32.mrf.mxu0
  %466 = vdwg.mxu0
  %467 = vmatpush.bf16.msra.mxu0 %v361
  %468 = vmatpush.bf16.msra.mxu0 %v357
  %469 = vmatpush.bf16.msra.mxu0 %v353
  %470 = vmatpush.bf16.msra.mxu0 %v349
  %471 = vmatpush.bf16.msra.mxu0 %v345
  %472 = vmatpush.bf16.msra.mxu0 %v341
  %473 = vmatpush.bf16.msra.mxu0 %v337
  %474 = vmatpush.bf16.msra.mxu0 %v333
  %475 = vmatmul.bf16.gmra.mxu0 %v105
  %v476 = vpop.f32.mrf.mxu0
  %v477 = vadd.f32 %v464, %v476
  %v478 = vpop.f32.mrf.mxu0
  %479 = vdwg.mxu0
  %480 = vmatpush.bf16.msra.mxu0 %v330
  %481 = vmatpush.bf16.msra.mxu0 %v326
  %482 = vmatpush.bf16.msra.mxu0 %v322
  %483 = vmatpush.bf16.msra.mxu0 %v318
  %484 = vmatpush.bf16.msra.mxu0 %v314
  %485 = vmatpush.bf16.msra.mxu0 %v310
  %486 = vmatpush.bf16.msra.mxu0 %v306
  %487 = vmatpush.bf16.msra.mxu0 %v302
  %488 = vmatmul.bf16.gmra.mxu0 %v104
  %v489 = vpop.f32.mrf.mxu0
  %v490 = vadd.f32 %v95, %v489
  %v491 = vpop.f32.mrf.mxu0
  %492 = vdwg.mxu0
  %493 = vmatpush.bf16.msra.mxu0 %v362
  %494 = vmatpush.bf16.msra.mxu0 %v358
  %495 = vmatpush.bf16.msra.mxu0 %v354
  %496 = vmatpush.bf16.msra.mxu0 %v350
  %497 = vmatpush.bf16.msra.mxu0 %v346
  %498 = vmatpush.bf16.msra.mxu0 %v342
  %499 = vmatpush.bf16.msra.mxu0 %v338
  %500 = vmatpush.bf16.msra.mxu0 %v334
  %501 = vmatmul.bf16.gmra.mxu0 %v105
  %v502 = vpop.f32.mrf.mxu0
  %v503 = vadd.f32 %v490, %v502
  %v504 = vpop.f32.mrf.mxu0
  %505 = vdwg.mxu0
  %506 = vmatpush.bf16.msra.mxu0 %v331
  %507 = vmatpush.bf16.msra.mxu0 %v327
  %508 = vmatpush.bf16.msra.mxu0 %v323
  %509 = vmatpush.bf16.msra.mxu0 %v319
  %510 = vmatpush.bf16.msra.mxu0 %v315
  %511 = vmatpush.bf16.msra.mxu0 %v311
  %512 = vmatpush.bf16.msra.mxu0 %v307
  %513 = vmatpush.bf16.msra.mxu0 %v303
  %514 = vmatmul.bf16.gmra.mxu0 %v104
  %v515 = vpop.f32.mrf.mxu0
  %v516 = vadd.f32 %v96, %v515
  %v517 = vpop.f32.mrf.mxu0
  %518 = vdwg.mxu0
  %519 = vmatpush.bf16.msra.mxu0 %v363
  %520 = vmatpush.bf16.msra.mxu0 %v359
  %521 = vmatpush.bf16.msra.mxu0 %v355
  %522 = vmatpush.bf16.msra.mxu0 %v351
  %523 = vmatpush.bf16.msra.mxu0 %v347
  %524 = vmatpush.bf16.msra.mxu0 %v343
  %525 = vmatpush.bf16.msra.mxu0 %v339
  %526 = vmatpush.bf16.msra.mxu0 %v335
  %527 = vmatmul.bf16.gmra.mxu0 %v105
  %v528 = vpop.f32.mrf.mxu0
  %v529 = vadd.f32 %v516, %v528
  %v530 = vpop.f32.mrf.mxu0
  %531 = vdwg.mxu0
  %v532 = vmax.f32 %v451, 0.0
  %v533 = vmax.f32 %v477, 0.0
  %v534 = vmax.f32 %v503, 0.0
  %v535 = vmax.f32 %v529, 0.0
  %v536 = vpack.c.bf16 %v532, %v532
  %v537 = vpack.c.bf16 %v533, %v533
  %v538 = vpack.c.bf16 %v534, %v534
  %v539 = vpack.c.bf16 %v535, %v535
  %v540 = vld [vmem:[%s3] sm:$0xf]
  %v541 = vld [vmem:[%s3 + $0x4] sm:$0xf]
  %v542 = vld [vmem:[%s3 + $0x8] sm:$0xf]
  %v543 = vld [vmem:[%s3 + $0xc] sm:$0xf]
  %v544 = vld [vmem:[%s3 + $0x10] sm:$0xf]
  %v545 = vld [vmem:[%s3 + $0x14] sm:$0xf]
  %v546 = vld [vmem:[%s3 + $0x18] sm:$0xf]
  %v547 = vld [vmem:[%s3 + $0x1c] sm:$0xf]
  %v548 = vld [vmem:[%s3 + $0x20] sm:$0xf]
  %v549 = vld [vmem:[%s3 + $0x24] sm:$0xf]
  %v550 = vld [vmem:[%s3 + $0x28] sm:$0xf]
  %v551 = vld [vmem:[%s3 + $0x2c] sm:$0xf]
  %v552 = vld [vmem:[%s3 + $0x30] sm:$0xf]
  %v553 = vld [vmem:[%s3 + $0x34] sm:$0xf]
  %v554 = vld [vmem:[%s3 + $0x38] sm:$0xf]
  %v555 = vld [vmem:[%s3 + $0x3c] sm:$0xf]
  %v556 = vld [vmem:[%s3 + $0x40] sm:$0xf]
  %v557 = vld [vmem:[%s3 + $0x44] sm:$0xf]
  %v558 = vld [vmem:[%s3 + $0x48] sm:$0xf]
  %v559 = vld [vmem:[%s3 + $0x4c] sm:$0xf]
  %v560 = vld [vmem:[%s3 + $0x50] sm:$0xf]
  %v561 = vld [vmem:[%s3 + $0x54] sm:$0xf]
  %v562 = vld [vmem:[%s3 + $0x58] sm:$0xf]
  %v563 = vld [vmem:[%s3 + $0x5c] sm:$0xf]
  %v564 = vld [vmem:[%s3 + $0x60] sm:$0xf]
  %v565 = vld [vmem:[%s3 + $0x64] sm:$0xf]
  %v566 = vld [vmem:[%s3 + $0x68] sm:$0xf]
  %v567 = vld [vmem:[%s3 + $0x6c] sm:$0xf]
  %v568 = vld [vmem:[%s3 + $0x70] sm:$0xf]
  %v569 = vld [vmem:[%s3 + $0x74] sm:$0xf]
  %v570 = vld [vmem:[%s3 + $0x78] sm:$0xf]
  %v571 = vld [vmem:[%s3 + $0x7c] sm:$0xf]
  %v572 = vld [vmem:[%s3 + $0x80] sm:$0xf]
  %v573 = vld [vmem:[%s3 + $0x84] sm:$0xf]
  %v574 = vld [vmem:[%s3 + $0x88] sm:$0xf]
  %v575 = vld [vmem:[%s3 + $0x8c] sm:$0xf]
  %v576 = vld [vmem:[%s3 + $0x90] sm:$0xf]
  %v577 = vld [vmem:[%s3 + $0x94] sm:$0xf]
  %v578 = vld [vmem:[%s3 + $0x98] sm:$0xf]
  %v579 = vld [vmem:[%s3 + $0x9c] sm:$0xf]
  %v580 = vld [vmem:[%s3 + $0xa0] sm:$0xf]
  %v581 = vld [vmem:[%s3 + $0xa4] sm:$0xf]
  %v582 = vld [vmem:[%s3 + $0xa8] sm:$0xf]
  %v583 = vld [vmem:[%s3 + $0xac] sm:$0xf]
  %v584 = vld [vmem:[%s3 + $0xb0] sm:$0xf]
  %v585 = vld [vmem:[%s3 + $0xb4] sm:$0xf]
  %v586 = vld [vmem:[%s3 + $0xb8] sm:$0xf]
  %v587 = vld [vmem:[%s3 + $0xbc] sm:$0xf]
  %v588 = vld [vmem:[%s3 + $0xc0] sm:$0xf]
  %v589 = vld [vmem:[%s3 + $0xc4] sm:$0xf]
  %v590 = vld [vmem:[%s3 + $0xc8] sm:$0xf]
  %v591 = vld [vmem:[%s3 + $0xcc] sm:$0xf]
  %v592 = vld [vmem:[%s3 + $0xd0] sm:$0xf]
  %v593 = vld [vmem:[%s3 + $0xd4] sm:$0xf]
  %v594 = vld [vmem:[%s3 + $0xd8] sm:$0xf]
  %v595 = vld [vmem:[%s3 + $0xdc] sm:$0xf]
  %v596 = vld [vmem:[%s3 + $0xe0] sm:$0xf]
  %v597 = vld [vmem:[%s3 + $0xe4] sm:$0xf]
  %v598 = vld [vmem:[%s3 + $0xe8] sm:$0xf]
  %v599 = vld [vmem:[%s3 + $0xec] sm:$0xf]
  %v600 = vld [vmem:[%s3 + $0xf0] sm:$0xf]
  %v601 = vld [vmem:[%s3 + $0xf4] sm:$0xf]
  %v602 = vld [vmem:[%s3 + $0xf8] sm:$0xf]
  %v603 = vld [vmem:[%s3 + $0xfc] sm:$0xf]
  %v604 = vld [vmem:[%s4] sm:$0x1]
  %v606 = vperm.slane %v604, 0
  %v672 = vunpack.c.l.b16 %v540
  %v673 = vunpack.c.l.b16 %v541
  %v674 = vunpack.c.l.b16 %v542
  %v675 = vunpack.c.l.b16 %v543
  %v676 = vunpack.c.l.b16 %v544
  %v677 = vunpack.c.l.b16 %v545
  %v678 = vunpack.c.l.b16 %v546
  %v679 = vunpack.c.l.b16 %v547
  %v680 = vunpack.c.l.b16 %v548
  %v681 = vunpack.c.l.b16 %v549
  %v682 = vunpack.c.l.b16 %v550
  %v683 = vunpack.c.l.b16 %v551
  %v684 = vunpack.c.l.b16 %v552
  %v685 = vunpack.c.l.b16 %v553
  %v686 = vunpack.c.l.b16 %v554
  %v687 = vunpack.c.l.b16 %v555
  %v688 = vunpack.c.l.b16 %v556
  %v689 = vunpack.c.l.b16 %v557
  %v690 = vunpack.c.l.b16 %v558
  %v691 = vunpack.c.l.b16 %v559
  %v692 = vunpack.c.l.b16 %v560
  %v693 = vunpack.c.l.b16 %v561
  %v694 = vunpack.c.l.b16 %v562
  %v695 = vunpack.c.l.b16 %v563
  %v696 = vunpack.c.l.b16 %v564
  %v697 = vunpack.c.l.b16 %v565
  %v698 = vunpack.c.l.b16 %v566
  %v699 = vunpack.c.l.b16 %v567
  %v700 = vunpack.c.l.b16 %v568
  %v701 = vunpack.c.l.b16 %v569
  %v702 = vunpack.c.l.b16 %v570
  %v703 = vunpack.c.l.b16 %v571
  %v704 = vunpack.c.l.b16 %v572
  %v705 = vunpack.c.l.b16 %v573
  %v706 = vunpack.c.l.b16 %v574
  %v707 = vunpack.c.l.b16 %v575
  %v708 = vunpack.c.l.b16 %v576
  %v709 = vunpack.c.l.b16 %v577
  %v710 = vunpack.c.l.b16 %v578
  %v711 = vunpack.c.l.b16 %v579
  %v712 = vunpack.c.l.b16 %v580
  %v713 = vunpack.c.l.b16 %v581
  %v714 = vunpack.c.l.b16 %v582
  %v715 = vunpack.c.l.b16 %v583
  %v716 = vunpack.c.l.b16 %v584
  %v717 = vunpack.c.l.b16 %v585
  %v718 = vunpack.c.l.b16 %v586
  %v719 = vunpack.c.l.b16 %v587
  %v720 = vunpack.c.l.b16 %v588
  %v721 = vunpack.c.l.b16 %v589
  %v722 = vunpack.c.l.b16 %v590
  %v723 = vunpack.c.l.b16 %v591
  %v724 = vunpack.c.l.b16 %v592
  %v725 = vunpack.c.l.b16 %v593
  %v726 = vunpack.c.l.b16 %v594
  %v727 = vunpack.c.l.b16 %v595
  %v728 = vunpack.c.l.b16 %v596
  %v729 = vunpack.c.l.b16 %v597
  %v730 = vunpack.c.l.b16 %v598
  %v731 = vunpack.c.l.b16 %v599
  %v732 = vunpack.c.l.b16 %v600
  %v733 = vunpack.c.l.b16 %v601
  %v734 = vunpack.c.l.b16 %v602
  %v735 = vunpack.c.l.b16 %v603
  %v736 = vpack.c.b16 %v673, %v672
  %v737 = vpack.c.b16 %v675, %v674
  %v738 = vpack.c.b16 %v677, %v676
  %v739 = vpack.c.b16 %v679, %v678
  %v740 = vpack.c.b16 %v681, %v680
  %v741 = vpack.c.b16 %v683, %v682
  %v742 = vpack.c.b16 %v685, %v684
  %v743 = vpack.c.b16 %v687, %v686
  %v744 = vpack.c.b16 %v689, %v688
  %v745 = vpack.c.b16 %v691, %v690
  %v746 = vpack.c.b16 %v693, %v692
  %v747 = vpack.c.b16 %v695, %v694
  %v748 = vpack.c.b16 %v697, %v696
  %v749 = vpack.c.b16 %v699, %v698
  %v750 = vpack.c.b16 %v701, %v700
  %v751 = vpack.c.b16 %v703, %v702
  %v752 = vpack.c.b16 %v705, %v704
  %v753 = vpack.c.b16 %v707, %v706
  %v754 = vpack.c.b16 %v709, %v708
  %v755 = vpack.c.b16 %v711, %v710
  %v756 = vpack.c.b16 %v713, %v712
  %v757 = vpack.c.b16 %v715, %v714
  %v758 = vpack.c.b16 %v717, %v716
  %v759 = vpack.c.b16 %v719, %v718
  %v760 = vpack.c.b16 %v721, %v720
  %v761 = vpack.c.b16 %v723, %v722
  %v762 = vpack.c.b16 %v725, %v724
  %v763 = vpack.c.b16 %v727, %v726
  %v764 = vpack.c.b16 %v729, %v728
  %v765 = vpack.c.b16 %v731, %v730
  %v766 = vpack.c.b16 %v733, %v732
  %v767 = vpack.c.b16 %v735, %v734
  %800 = vmatpush.bf16.msra.mxu0 %v743
  %801 = vmatpush.bf16.msra.mxu0 %v742
  %802 = vmatpush.bf16.msra.mxu0 %v741
  %803 = vmatpush.bf16.msra.mxu0 %v740
  %804 = vmatpush.bf16.msra.mxu0 %v739
  %805 = vmatpush.bf16.msra.mxu0 %v738
  %806 = vmatpush.bf16.msra.mxu0 %v737
  %807 = vmatpush.bf16.msra.mxu0 %v736
  %808 = vmatmul.bf16.gmra.mxu0 %v536
  %v809 = vpop.f32.mrf.mxu0
  %v810 = vadd.f32 %v606, %v809
  %v811 = vpop.f32.mrf.mxu0
  %812 = vdwg.mxu0
  %813 = vmatpush.bf16.msra.mxu0 %v751
  %814 = vmatpush.bf16.msra.mxu0 %v750
  %815 = vmatpush.bf16.msra.mxu0 %v749
  %816 = vmatpush.bf16.msra.mxu0 %v748
  %817 = vmatpush.bf16.msra.mxu0 %v747
  %818 = vmatpush.bf16.msra.mxu0 %v746
  %819 = vmatpush.bf16.msra.mxu0 %v745
  %820 = vmatpush.bf16.msra.mxu0 %v744
  %821 = vmatmul.bf16.gmra.mxu0 %v537
  %v822 = vpop.f32.mrf.mxu0
  %v823 = vadd.f32 %v810, %v822
  %v824 = vpop.f32.mrf.mxu0
  %825 = vdwg.mxu0
  %826 = vmatpush.bf16.msra.mxu0 %v759
  %827 = vmatpush.bf16.msra.mxu0 %v758
  %828 = vmatpush.bf16.msra.mxu0 %v757
  %829 = vmatpush.bf16.msra.mxu0 %v756
  %830 = vmatpush.bf16.msra.mxu0 %v755
  %831 = vmatpush.bf16.msra.mxu0 %v754
  %832 = vmatpush.bf16.msra.mxu0 %v753
  %833 = vmatpush.bf16.msra.mxu0 %v752
  %834 = vmatmul.bf16.gmra.mxu0 %v538
  %v835 = vpop.f32.mrf.mxu0
  %v836 = vadd.f32 %v823, %v835
  %v837 = vpop.f32.mrf.mxu0
  %838 = vdwg.mxu0
  %839 = vmatpush.bf16.msra.mxu0 %v767
  %840 = vmatpush.bf16.msra.mxu0 %v766
  %841 = vmatpush.bf16.msra.mxu0 %v765
  %842 = vmatpush.bf16.msra.mxu0 %v764
  %843 = vmatpush.bf16.msra.mxu0 %v763
  %844 = vmatpush.bf16.msra.mxu0 %v762
  %845 = vmatpush.bf16.msra.mxu0 %v761
  %846 = vmatpush.bf16.msra.mxu0 %v760
  %847 = vmatmul.bf16.gmra.mxu0 %v539
  %v848 = vpop.f32.mrf.mxu0
  %v849 = vadd.f32 %v836, %v848
  %v850 = vpop.f32.mrf.mxu0
  %851 = vdwg.mxu0
  %v852 = vmax.f32 %v849, 0.0
  %v853 = vpack.c.bf16 %v852, %v852
  %v854 = vld [vmem:[%s5] sm:$0xf]
  %v855 = vld [vmem:[%s5 + $0x4] sm:$0xf]
  %v856 = vld [vmem:[%s5 + $0x8] sm:$0xf]
  %v857 = vld [vmem:[%s5 + $0xc] sm:$0xf]
  %v858 = vld [vmem:[%s5 + $0x10] sm:$0xf]
  %v859 = vld [vmem:[%s5 + $0x14] sm:$0xf]
  %v860 = vld [vmem:[%s5 + $0x18] sm:$0xf]
  %v861 = vld [vmem:[%s5 + $0x1c] sm:$0xf]
  %v862 = vld [vmem:[%s5 + $0x20] sm:$0xf]
  %v863 = vld [vmem:[%s5 + $0x24] sm:$0xf]
  %v864 = vld [vmem:[%s5 + $0x28] sm:$0xf]
  %v865 = vld [vmem:[%s5 + $0x2c] sm:$0xf]
  %v866 = vld [vmem:[%s5 + $0x30] sm:$0xf]
  %v867 = vld [vmem:[%s5 + $0x34] sm:$0xf]
  %v868 = vld [vmem:[%s5 + $0x38] sm:$0xf]
  %v869 = vld [vmem:[%s5 + $0x3c] sm:$0xf]
  %v870 = vld [vmem:[%s6] sm:$0x1]
  %v872 = vperm.slane %v870, 0
  %v890 = vunpack.c.l.b16 %v854
  %v891 = vunpack.c.l.b16 %v855
  %v892 = vunpack.c.l.b16 %v856
  %v893 = vunpack.c.l.b16 %v857
  %v894 = vunpack.c.l.b16 %v858
  %v895 = vunpack.c.l.b16 %v859
  %v896 = vunpack.c.l.b16 %v860
  %v897 = vunpack.c.l.b16 %v861
  %v898 = vunpack.c.l.b16 %v862
  %v899 = vunpack.c.l.b16 %v863
  %v900 = vunpack.c.l.b16 %v864
  %v901 = vunpack.c.l.b16 %v865
  %v902 = vunpack.c.l.b16 %v866
  %v903 = vunpack.c.l.b16 %v867
  %v904 = vunpack.c.l.b16 %v868
  %v905 = vunpack.c.l.b16 %v869
  %v906 = vpack.c.b16 %v891, %v890
  %v907 = vpack.c.b16 %v893, %v892
  %v908 = vpack.c.b16 %v895, %v894
  %v909 = vpack.c.b16 %v897, %v896
  %v910 = vpack.c.b16 %v899, %v898
  %v911 = vpack.c.b16 %v901, %v900
  %v912 = vpack.c.b16 %v903, %v902
  %v913 = vpack.c.b16 %v905, %v904
  %922 = vmatpush.bf16.msra.mxu0 %v913
  %923 = vmatpush.bf16.msra.mxu0 %v912
  %924 = vmatpush.bf16.msra.mxu0 %v911
  %925 = vmatpush.bf16.msra.mxu0 %v910
  %926 = vmatpush.bf16.msra.mxu0 %v909
  %927 = vmatpush.bf16.msra.mxu0 %v908
  %928 = vmatpush.bf16.msra.mxu0 %v907
  %929 = vmatpush.bf16.msra.mxu0 %v906
  %930 = vmatmul.bf16.gmra.mxu0 %v853
  %v931 = vpop.f32.mrf.mxu0
  %v932 = vadd.f32 %v872, %v931
  %v933 = vpop.f32.mrf.mxu0
  %934 = vdwg.mxu0
  %935 = vst [vmem:[%s7] sm:$0xff] %v932
  // Predicated region
  $region30: #{speed_estimator_forward.3} parent=0 // pred_check
    _
  $region31: #{speed_estimator_forward.3} parent=0 // pred_check_branch
    %937 = sbr.rel (0) target = $region33
  $region32: #{speed_estimator_forward.3} parent=0 // pred_region
    _
  $region33: #{speed_estimator_forward.3} parent=0 // pred_fallthru
    _
  // Predicated region
  $region34: #{speed_estimator_forward.3} parent=0 // pred_check
    _
  $region35: #{speed_estimator_forward.3} parent=0 // pred_check_branch
    %939 = sbr.rel (0) target = $region37
  $region36: #{speed_estimator_forward.3} parent=0 // pred_region
    _
  $region37: #{speed_estimator_forward.3} parent=0 // pred_fallthru
    _

</llo_original>
